<compile_context>
chip_gen: v5e
topology: v5e:2x2
jax: 0.10.0
libtpu: 0.0.40
codegen_flags: <defaults>
</compile_context>

<pallas_src>
import functools

import jax
import jax.numpy as jnp
from jax import lax
from jax.experimental import pallas as pl
from jax.experimental.pallas import tpu as pltpu


def _round_up(x, m):
    return ((x + m - 1) // m) * m


def _lstm_kernel(x_ref, wih_ref, whh_ref, b_ref,
                 out_ref, hout_ref, cout_ref,
                 xw_sc, h_sc, c_sc,
                 *, hidden_pad, batch_pad, chunk):
    """One grid step processes `chunk` consecutive timesteps.

    x_ref   : (chunk*Bp, I)    time-major rows (row = local_t*Bp + b)
    wih_ref : (I, 4*Hp)        W_ih^T, gates repacked into Hp-wide slabs
    whh_ref : (Hp, 4*Hp)       W_hh^T, gates repacked into Hp-wide slabs
    b_ref   : (1, 4*Hp)        b_ih + b_hh, repacked
    out_ref : (chunk*Bp, Hp)   hidden states for the chunk
    hout/cout : (Bp, Hp)       final h / c (written on last grid step)
    xw_sc   : (chunk*Bp, 4*Hp) scratch: input projection for the chunk
    h_sc/c_sc : (Bp, Hp)       recurrent carries (persist across grid steps)
    """
    Hp = hidden_pad
    Bp = batch_pad
    tc_idx = pl.program_id(0)

    @pl.when(tc_idx == 0)
    def _():
        # initHiddenCell: zeros for h0, c0 (+ hygiene init of final outputs).
        h_sc[...] = jnp.zeros_like(h_sc)
        c_sc[...] = jnp.zeros_like(c_sc)
        hout_ref[...] = jnp.zeros_like(hout_ref)
        cout_ref[...] = jnp.zeros_like(cout_ref)

    # ---- Phase 1: input projection for the whole chunk (one MXU matmul). ----
    xw_sc[...] = (
        jnp.dot(x_ref[...], wih_ref[...], preferred_element_type=jnp.float32)
        + b_ref[...]
    )

    whh = whh_ref[...]  # (Hp, 4Hp), loaded once per chunk

    # ---- Phase 2: sequential recurrence over the chunk (static unroll). ----
    for lt in range(chunk):
        row = lt * Bp  # static, sublane-aligned (Bp is a multiple of 8)
        gates = xw_sc[pl.ds(row, Bp), :] + jnp.dot(
            h_sc[...], whh, preferred_element_type=jnp.float32)

        # Each gate occupies its own lane-aligned Hp-wide slab.
        i_g = jax.nn.sigmoid(gates[:, 0 * Hp:1 * Hp])
        f_g = jax.nn.sigmoid(gates[:, 1 * Hp:2 * Hp])
        g_g = jnp.tanh(gates[:, 2 * Hp:3 * Hp])
        o_g = jax.nn.sigmoid(gates[:, 3 * Hp:4 * Hp])

        c_new = f_g * c_sc[...] + i_g * g_g
        h_new = o_g * jnp.tanh(c_new)

        c_sc[...] = c_new
        h_sc[...] = h_new
        out_ref[pl.ds(row, Bp), :] = h_new.astype(out_ref.dtype)

    @pl.when(tc_idx == pl.num_programs(0) - 1)
    def _():
        hout_ref[...] = h_sc[...].astype(hout_ref.dtype)
        cout_ref[...] = c_sc[...].astype(cout_ref.dtype)


def encoder_lstm_forward(x, w_ih, w_hh, b_ih, b_hh, *, max_time_chunk=8):
    """x: (B, T, I) float32. Weights in PyTorch layout:
       w_ih (4H, I), w_hh (4H, H), b_ih (4H,), b_hh (4H,).
       Returns (output (B, T, H), (h (B, H), c (B, H)))."""
    B, T, I = x.shape
    H = w_hh.shape[1]

    Bp = _round_up(B, 8)     # f32 sublane multiple
    Hp = _round_up(H, 128)   # lane multiple -> lane-aligned gate slabs

    # Largest time chunk that divides T (keeps recurrence exact, no masking).
    Tc = 1
    for cand in range(min(max_time_chunk, T), 0, -1):
        if T % cand == 0:
            Tc = cand
            break

    # --- Repack weights: gate g of PyTorch's (i,f,g,o) stack goes into its own
    #     lane-aligned Hp-wide slab; pad hidden dim with zeros (padded hidden
    #     units stay exactly 0 through the recurrence). ---
    def repack_gate_cols(w_t):  # (rows, 4H) -> (rows, 4Hp)
        parts = []
        for g in range(4):
            blk = w_t[:, g * H:(g + 1) * H]
            parts.append(jnp.pad(blk, ((0, 0), (0, Hp - H))))
        return jnp.concatenate(parts, axis=1)

    wih_t = repack_gate_cols(jnp.transpose(w_ih).astype(jnp.float32))   # (I, 4Hp)
    whh_t = repack_gate_cols(jnp.transpose(w_hh).astype(jnp.float32))   # (H, 4Hp)
    whh_t = jnp.pad(whh_t, ((0, Hp - H), (0, 0)))                       # (Hp, 4Hp)
    bias = repack_gate_cols((b_ih + b_hh).astype(jnp.float32)[None, :])  # (1, 4Hp)

    # --- Time-major, batch-padded, flattened-to-2D input: row = t*Bp + b. ---
    x_p = jnp.pad(x.astype(jnp.float32), ((0, Bp - B), (0, 0), (0, 0)))  # (Bp,T,I)
    x2d = jnp.transpose(x_p, (1, 0, 2)).reshape(T * Bp, I)               # (T*Bp, I)

    kernel = functools.partial(
        _lstm_kernel, hidden_pad=Hp, batch_pad=Bp, chunk=Tc)

    out2d, h_last, c_last = pl.pallas_call(
        kernel,
        out_shape=(
            jax.ShapeDtypeStruct((T * Bp, Hp), jnp.float32),
            jax.ShapeDtypeStruct((Bp, Hp), jnp.float32),
            jax.ShapeDtypeStruct((Bp, Hp), jnp.float32),
        ),
        grid_spec=pltpu.PrefetchScalarGridSpec(
            num_scalar_prefetch=0,
            grid=(T // Tc,),
            in_specs=[
                pl.BlockSpec((Tc * Bp, I), lambda t: (t, 0)),     # x chunk
                pl.BlockSpec((I, 4 * Hp), lambda t: (0, 0)),      # W_ih^T
                pl.BlockSpec((Hp, 4 * Hp), lambda t: (0, 0)),     # W_hh^T
                pl.BlockSpec((1, 4 * Hp), lambda t: (0, 0)),      # bias
            ],
            out_specs=[
                pl.BlockSpec((Tc * Bp, Hp), lambda t: (t, 0)),    # outputs
                pl.BlockSpec((Bp, Hp), lambda t: (0, 0)),         # final h
                pl.BlockSpec((Bp, Hp), lambda t: (0, 0)),         # final c
            ],
            scratch_shapes=[
                pltpu.VMEM((Tc * Bp, 4 * Hp), jnp.float32),       # x-projection
                pltpu.VMEM((Bp, Hp), jnp.float32),                # h carry
                pltpu.VMEM((Bp, Hp), jnp.float32),                # c carry
            ],
        ),
        compiler_params=pltpu.CompilerParams(
            dimension_semantics=("arbitrary",),      # sequential recurrence
            vmem_limit_bytes=32 * 1024 * 1024,
        ),
    )(x2d, wih_t, whh_t, bias)

    # Unpad / restore batch_first layout.
    out_tm = out2d.reshape(T, Bp, Hp)[:, :B, :H]      # (T, B, H)
    output = jnp.transpose(out_tm, (1, 0, 2))         # (B, T, H)
    h_n = h_last[:B, :H]
    c_n = c_last[:B, :H]
    return output, (h_n, c_n)


def _reference_lstm(x, w_ih, w_hh, b_ih, b_hh):
    """Pure-JAX reference matching torch.nn.LSTM semantics (batch_first)."""
    B, T, I = x.shape
    H = w_hh.shape[1]
    bias = b_ih + b_hh

    def step(carry, x_t):
        h, c = carry
        gates = x_t @ w_ih.T + h @ w_hh.T + bias
        i_g = jax.nn.sigmoid(gates[:, 0 * H:1 * H])
        f_g = jax.nn.sigmoid(gates[:, 1 * H:2 * H])
        g_g = jnp.tanh(gates[:, 2 * H:3 * H])
        o_g = jax.nn.sigmoid(gates[:, 3 * H:4 * H])
        c_new = f_g * c + i_g * g_g
        h_new = o_g * jnp.tanh(c_new)
        return (h_new, c_new), h_new

    init = (jnp.zeros((B, H), jnp.float32), jnp.zeros((B, H), jnp.float32))
    (h_last, c_last), outs = lax.scan(step, init, jnp.transpose(x, (1, 0, 2)))
    return jnp.transpose(outs, (1, 0, 2)), (h_last, c_last)


if __name__ == "__main__":
    # Small shapes consistent with the module: batch=2, seq=8,
    # input_size=4, hidden_size=32.
    B, T, I, H = 2, 8, 4, 32

    key = jax.random.PRNGKey(0)
    k_x, k_wih, k_whh, k_bih, k_bhh = jax.random.split(key, 5)

    x = jax.random.normal(k_x, (B, T, I), dtype=jnp.float32)
    scale = 1.0 / jnp.sqrt(jnp.float32(H))
    w_ih = jax.random.uniform(k_wih, (4 * H, I), jnp.float32, -scale, scale)
    w_hh = jax.random.uniform(k_whh, (4 * H, H), jnp.float32, -scale, scale)
    b_ih = jax.random.uniform(k_bih, (4 * H,), jnp.float32, -scale, scale)
    b_hh = jax.random.uniform(k_bhh, (4 * H,), jnp.float32, -scale, scale)

    output, (h_n, c_n) = encoder_lstm_forward(x, w_ih, w_hh, b_ih, b_hh)
    jax.block_until_ready((output, h_n, c_n))

    # Self-check against pure-JAX reference (matches PyTorch LSTM math).
    ref_out, (ref_h, ref_c) = _reference_lstm(x, w_ih, w_hh, b_ih, b_hh)
    assert output.shape == (B, T, H)
    assert h_n.shape == (B, H) and c_n.shape == (B, H)
    assert jnp.allclose(output, ref_out, atol=1e-5, rtol=1e-5)
    assert jnp.allclose(h_n, ref_h, atol=1e-5, rtol=1e-5)
    assert jnp.allclose(c_n, ref_c, atol=1e-5, rtol=1e-5)

    print("KERNEL_OK")
</pallas_src>

<mosaic_0001>
module attributes {stable_mosaic.version = 11 : i64} {
  func.func @_lstm_kernel(%arg0: i32, %arg1: memref<64x4xf32, #tpu.memory_space<vmem>>, %arg2: memref<4x512xf32, #tpu.memory_space<vmem>>, %arg3: memref<128x512xf32, #tpu.memory_space<vmem>>, %arg4: memref<1x512xf32, #tpu.memory_space<vmem>>, %arg5: memref<64x128xf32, #tpu.memory_space<vmem>>, %arg6: memref<8x128xf32, #tpu.memory_space<vmem>>, %arg7: memref<8x128xf32, #tpu.memory_space<vmem>>, %arg8: memref<64x512xf32, #tpu.memory_space<vmem>>, %arg9: memref<8x128xf32, #tpu.memory_space<vmem>>, %arg10: memref<8x128xf32, #tpu.memory_space<vmem>>) attributes {dimension_semantics = [#tpu.dimension_semantics<arbitrary>], iteration_bounds = array<i64: 1>, scalar_prefetch = 0 : i64, scratch_operands = 3 : i64, tpu.core_type = #tpu.core_type<tc>, window_params = [{transform_indices = @transform_0, window_bounds = array<i64: 64, 4>}, {pipeline_mode = #tpu.pipeline_mode<synchronous>, transform_indices = @transform_1, window_bounds = array<i64: 4, 512>}, {pipeline_mode = #tpu.pipeline_mode<synchronous>, transform_indices = @transform_2, window_bounds = array<i64: 128, 512>}, {pipeline_mode = #tpu.pipeline_mode<synchronous>, transform_indices = @transform_3, window_bounds = array<i64: 1, 512>}, {transform_indices = @transform_4, window_bounds = array<i64: 64, 128>}, {pipeline_mode = #tpu.pipeline_mode<synchronous>, transform_indices = @transform_5, window_bounds = array<i64: 8, 128>}, {pipeline_mode = #tpu.pipeline_mode<synchronous>, transform_indices = @transform_6, window_bounds = array<i64: 8, 128>}]} {
    %c0_i32 = arith.constant 0 : i32
    %0 = arith.cmpi eq, %arg0, %c0_i32 : i32
    %1 = arith.extui %0 : i1 to i32
    %c0_i32_0 = arith.constant 0 : i32
    %2 = arith.cmpi ne, %1, %c0_i32_0 : i32
    scf.if %2 {
      %cst_133 = arith.constant 0.000000e+00 : f32
      %278 = vector.broadcast %cst_133 : f32 to vector<8x128xf32>
      %c0_134 = arith.constant 0 : index
      %c0_135 = arith.constant 0 : index
      %279 = vector.load %arg9[%c0_134, %c0_135] : memref<8x128xf32, #tpu.memory_space<vmem>>, vector<8x128xf32>
      tpu.vector_store %arg9[%c0_134, %c0_135], %278 {strides = array<i32>} : memref<8x128xf32, #tpu.memory_space<vmem>>, vector<8x128xf32>,
      %cst_136 = arith.constant 0.000000e+00 : f32
      %280 = vector.broadcast %cst_136 : f32 to vector<8x128xf32>
      %c0_137 = arith.constant 0 : index
      %c0_138 = arith.constant 0 : index
      %281 = vector.load %arg10[%c0_137, %c0_138] : memref<8x128xf32, #tpu.memory_space<vmem>>, vector<8x128xf32>
      tpu.vector_store %arg10[%c0_137, %c0_138], %280 {strides = array<i32>} : memref<8x128xf32, #tpu.memory_space<vmem>>, vector<8x128xf32>,
      %cst_139 = arith.constant 0.000000e+00 : f32
      %282 = vector.broadcast %cst_139 : f32 to vector<8x128xf32>
      %c0_140 = arith.constant 0 : index
      %c0_141 = arith.constant 0 : index
      %283 = vector.load %arg6[%c0_140, %c0_141] : memref<8x128xf32, #tpu.memory_space<vmem>>, vector<8x128xf32>
      tpu.vector_store %arg6[%c0_140, %c0_141], %282 {strides = array<i32>} : memref<8x128xf32, #tpu.memory_space<vmem>>, vector<8x128xf32>,
      %cst_142 = arith.constant 0.000000e+00 : f32
      %284 = vector.broadcast %cst_142 : f32 to vector<8x128xf32>
      %c0_143 = arith.constant 0 : index
      %c0_144 = arith.constant 0 : index
      %285 = vector.load %arg7[%c0_143, %c0_144] : memref<8x128xf32, #tpu.memory_space<vmem>>, vector<8x128xf32>
      tpu.vector_store %arg7[%c0_143, %c0_144], %284 {strides = array<i32>} : memref<8x128xf32, #tpu.memory_space<vmem>>, vector<8x128xf32>,
    } else {
    }
    %c0 = arith.constant 0 : index
    %c0_1 = arith.constant 0 : index
    %3 = vector.load %arg1[%c0, %c0_1] : memref<64x4xf32, #tpu.memory_space<vmem>>, vector<64x4xf32>
    %c0_2 = arith.constant 0 : index
    %c0_3 = arith.constant 0 : index
    %4 = vector.load %arg2[%c0_2, %c0_3] : memref<4x512xf32, #tpu.memory_space<vmem>>, vector<4x512xf32>
    %cst = arith.constant dense<0.000000e+00> : vector<64x512xf32>
    %5 = tpu.matmul %3, %4, %cst {dimension_numbers = #tpu.dot_dimension_numbers<[1], [0], [0], [1], [0, 0, 1, 1], [], []>} : vector<64x4xf32>, vector<4x512xf32>, vector<64x512xf32> -> vector<64x512xf32>
    %c0_4 = arith.constant 0 : index
    %c0_5 = arith.constant 0 : index
    %6 = vector.load %arg4[%c0_4, %c0_5] : memref<1x512xf32, #tpu.memory_space<vmem>>, vector<1x512xf32>
    %7 = vector.broadcast %6 : vector<1x512xf32> to vector<64x512xf32>
    %8 = arith.addf %5, %7 : vector<64x512xf32>
    %c0_6 = arith.constant 0 : index
    %c0_7 = arith.constant 0 : index
    %9 = vector.load %arg8[%c0_6, %c0_7] : memref<64x512xf32, #tpu.memory_space<vmem>>, vector<64x512xf32>
    tpu.vector_store %arg8[%c0_6, %c0_7], %8 {strides = array<i32>} : memref<64x512xf32, #tpu.memory_space<vmem>>, vector<64x512xf32>,
    %c0_8 = arith.constant 0 : index
    %c0_9 = arith.constant 0 : index
    %10 = vector.load %arg3[%c0_8, %c0_9] : memref<128x512xf32, #tpu.memory_space<vmem>>, vector<128x512xf32>
    %c0_10 = arith.constant 0 : index
    %c0_11 = arith.constant 0 : index
    %11 = vector.load %arg8[%c0_10, %c0_11] : memref<64x512xf32, #tpu.memory_space<vmem>>, vector<8x512xf32>
    %c0_12 = arith.constant 0 : index
    %c0_13 = arith.constant 0 : index
    %12 = vector.load %arg9[%c0_12, %c0_13] : memref<8x128xf32, #tpu.memory_space<vmem>>, vector<8x128xf32>
    %cst_14 = arith.constant dense<0.000000e+00> : vector<8x512xf32>
    %13 = tpu.matmul %12, %10, %cst_14 {dimension_numbers = #tpu.dot_dimension_numbers<[1], [0], [0], [1], [0, 0, 1, 1], [], []>} : vector<8x128xf32>, vector<128x512xf32>, vector<8x512xf32> -> vector<8x512xf32>
    %14 = arith.addf %11, %13 : vector<8x512xf32>
    %15 = vector.extract_strided_slice %14 {offsets = [0, 0], sizes = [8, 128], strides = [1, 1]} : vector<8x512xf32> to vector<8x128xf32>
    %16 = arith.negf %15 : vector<8x128xf32>
    %17 = math.exp %16 : vector<8x128xf32>
    %cst_15 = arith.constant 1.000000e+00 : f32
    %18 = vector.broadcast %cst_15 : f32 to vector<8x128xf32>
    %19 = arith.addf %18, %17 : vector<8x128xf32>
    %20 = arith.divf %18, %19 : vector<8x128xf32>
    %21 = vector.extract_strided_slice %14 {offsets = [0, 128], sizes = [8, 128], strides = [1, 1]} : vector<8x512xf32> to vector<8x128xf32>
    %22 = arith.negf %21 : vector<8x128xf32>
    %23 = math.exp %22 : vector<8x128xf32>
    %cst_16 = arith.constant 1.000000e+00 : f32
    %24 = vector.broadcast %cst_16 : f32 to vector<8x128xf32>
    %25 = arith.addf %24, %23 : vector<8x128xf32>
    %26 = arith.divf %24, %25 : vector<8x128xf32>
    %27 = vector.extract_strided_slice %14 {offsets = [0, 256], sizes = [8, 128], strides = [1, 1]} : vector<8x512xf32> to vector<8x128xf32>
    %28 = math.tanh %27 : vector<8x128xf32>
    %29 = vector.extract_strided_slice %14 {offsets = [0, 384], sizes = [8, 128], strides = [1, 1]} : vector<8x512xf32> to vector<8x128xf32>
    %30 = arith.negf %29 : vector<8x128xf32>
    %31 = math.exp %30 : vector<8x128xf32>
    %cst_17 = arith.constant 1.000000e+00 : f32
    %32 = vector.broadcast %cst_17 : f32 to vector<8x128xf32>
    %33 = arith.addf %32, %31 : vector<8x128xf32>
    %34 = arith.divf %32, %33 : vector<8x128xf32>
    %c0_18 = arith.constant 0 : index
    %c0_19 = arith.constant 0 : index
    %35 = vector.load %arg10[%c0_18, %c0_19] : memref<8x128xf32, #tpu.memory_space<vmem>>, vector<8x128xf32>
    %36 = arith.mulf %26, %35 : vector<8x128xf32>
    %37 = arith.mulf %20, %28 : vector<8x128xf32>
    %38 = arith.addf %36, %37 : vector<8x128xf32>
    %39 = math.tanh %38 : vector<8x128xf32>
    %40 = arith.mulf %34, %39 : vector<8x128xf32>
    %c0_20 = arith.constant 0 : index
    %c0_21 = arith.constant 0 : index
    %41 = vector.load %arg10[%c0_20, %c0_21] : memref<8x128xf32, #tpu.memory_space<vmem>>, vector<8x128xf32>
    tpu.vector_store %arg10[%c0_20, %c0_21], %38 {strides = array<i32>} : memref<8x128xf32, #tpu.memory_space<vmem>>, vector<8x128xf32>,
    %c0_22 = arith.constant 0 : index
    %c0_23 = arith.constant 0 : index
    %42 = vector.load %arg9[%c0_22, %c0_23] : memref<8x128xf32, #tpu.memory_space<vmem>>, vector<8x128xf32>
    tpu.vector_store %arg9[%c0_22, %c0_23], %40 {strides = array<i32>} : memref<8x128xf32, #tpu.memory_space<vmem>>, vector<8x128xf32>,
    %c0_24 = arith.constant 0 : index
    %c0_25 = arith.constant 0 : index
    %43 = vector.load %arg5[%c0_24, %c0_25] : memref<64x128xf32, #tpu.memory_space<vmem>>, vector<8x128xf32>
    tpu.vector_store %arg5[%c0_24, %c0_25], %40 {strides = array<i32>} : memref<64x128xf32, #tpu.memory_space<vmem>>, vector<8x128xf32>,
    %c8 = arith.constant 8 : index
    %c0_26 = arith.constant 0 : index
    %44 = vector.load %arg8[%c8, %c0_26] : memref<64x512xf32, #tpu.memory_space<vmem>>, vector<8x512xf32>
    %c0_27 = arith.constant 0 : index
    %c0_28 = arith.constant 0 : index
    %45 = vector.load %arg9[%c0_27, %c0_28] : memref<8x128xf32, #tpu.memory_space<vmem>>, vector<8x128xf32>
    %cst_29 = arith.constant dense<0.000000e+00> : vector<8x512xf32>
    %46 = tpu.matmul %45, %10, %cst_29 {dimension_numbers = #tpu.dot_dimension_numbers<[1], [0], [0], [1], [0, 0, 1, 1], [], []>} : vector<8x128xf32>, vector<128x512xf32>, vector<8x512xf32> -> vector<8x512xf32>
    %47 = arith.addf %44, %46 : vector<8x512xf32>
    %48 = vector.extract_strided_slice %47 {offsets = [0, 0], sizes = [8, 128], strides = [1, 1]} : vector<8x512xf32> to vector<8x128xf32>
    %49 = arith.negf %48 : vector<8x128xf32>
    %50 = math.exp %49 : vector<8x128xf32>
    %cst_30 = arith.constant 1.000000e+00 : f32
    %51 = vector.broadcast %cst_30 : f32 to vector<8x128xf32>
    %52 = arith.addf %51, %50 : vector<8x128xf32>
    %53 = arith.divf %51, %52 : vector<8x128xf32>
    %54 = vector.extract_strided_slice %47 {offsets = [0, 128], sizes = [8, 128], strides = [1, 1]} : vector<8x512xf32> to vector<8x128xf32>
    %55 = arith.negf %54 : vector<8x128xf32>
    %56 = math.exp %55 : vector<8x128xf32>
    %cst_31 = arith.constant 1.000000e+00 : f32
    %57 = vector.broadcast %cst_31 : f32 to vector<8x128xf32>
    %58 = arith.addf %57, %56 : vector<8x128xf32>
    %59 = arith.divf %57, %58 : vector<8x128xf32>
    %60 = vector.extract_strided_slice %47 {offsets = [0, 256], sizes = [8, 128], strides = [1, 1]} : vector<8x512xf32> to vector<8x128xf32>
    %61 = math.tanh %60 : vector<8x128xf32>
    %62 = vector.extract_strided_slice %47 {offsets = [0, 384], sizes = [8, 128], strides = [1, 1]} : vector<8x512xf32> to vector<8x128xf32>
    %63 = arith.negf %62 : vector<8x128xf32>
    %64 = math.exp %63 : vector<8x128xf32>
    %cst_32 = arith.constant 1.000000e+00 : f32
    %65 = vector.broadcast %cst_32 : f32 to vector<8x128xf32>
    %66 = arith.addf %65, %64 : vector<8x128xf32>
    %67 = arith.divf %65, %66 : vector<8x128xf32>
    %c0_33 = arith.constant 0 : index
    %c0_34 = arith.constant 0 : index
    %68 = vector.load %arg10[%c0_33, %c0_34] : memref<8x128xf32, #tpu.memory_space<vmem>>, vector<8x128xf32>
    %69 = arith.mulf %59, %68 : vector<8x128xf32>
    %70 = arith.mulf %53, %61 : vector<8x128xf32>
    %71 = arith.addf %69, %70 : vector<8x128xf32>
    %72 = math.tanh %71 : vector<8x128xf32>
    %73 = arith.mulf %67, %72 : vector<8x128xf32>
    %c0_35 = arith.constant 0 : index
    %c0_36 = arith.constant 0 : index
    %74 = vector.load %arg10[%c0_35, %c0_36] : memref<8x128xf32, #tpu.memory_space<vmem>>, vector<8x128xf32>
    tpu.vector_store %arg10[%c0_35, %c0_36], %71 {strides = array<i32>} : memref<8x128xf32, #tpu.memory_space<vmem>>, vector<8x128xf32>,
    %c0_37 = arith.constant 0 : index
    %c0_38 = arith.constant 0 : index
    %75 = vector.load %arg9[%c0_37, %c0_38] : memref<8x128xf32, #tpu.memory_space<vmem>>, vector<8x128xf32>
    tpu.vector_store %arg9[%c0_37, %c0_38], %73 {strides = array<i32>} : memref<8x128xf32, #tpu.memory_space<vmem>>, vector<8x128xf32>,
    %c8_39 = arith.constant 8 : index
    %c0_40 = arith.constant 0 : index
    %76 = vector.load %arg5[%c8_39, %c0_40] : memref<64x128xf32, #tpu.memory_space<vmem>>, vector<8x128xf32>
    tpu.vector_store %arg5[%c8_39, %c0_40], %73 {strides = array<i32>} : memref<64x128xf32, #tpu.memory_space<vmem>>, vector<8x128xf32>,
    %c16 = arith.constant 16 : index
    %c0_41 = arith.constant 0 : index
    %77 = vector.load %arg8[%c16, %c0_41] : memref<64x512xf32, #tpu.memory_space<vmem>>, vector<8x512xf32>
    %c0_42 = arith.constant 0 : index
    %c0_43 = arith.constant 0 : index
    %78 = vector.load %arg9[%c0_42, %c0_43] : memref<8x128xf32, #tpu.memory_space<vmem>>, vector<8x128xf32>
    %cst_44 = arith.constant dense<0.000000e+00> : vector<8x512xf32>
    %79 = tpu.matmul %78, %10, %cst_44 {dimension_numbers = #tpu.dot_dimension_numbers<[1], [0], [0], [1], [0, 0, 1, 1], [], []>} : vector<8x128xf32>, vector<128x512xf32>, vector<8x512xf32> -> vector<8x512xf32>
    %80 = arith.addf %77, %79 : vector<8x512xf32>
    %81 = vector.extract_strided_slice %80 {offsets = [0, 0], sizes = [8, 128], strides = [1, 1]} : vector<8x512xf32> to vector<8x128xf32>
    %82 = arith.negf %81 : vector<8x128xf32>
    %83 = math.exp %82 : vector<8x128xf32>
    %cst_45 = arith.constant 1.000000e+00 : f32
    %84 = vector.broadcast %cst_45 : f32 to vector<8x128xf32>
    %85 = arith.addf %84, %83 : vector<8x128xf32>
    %86 = arith.divf %84, %85 : vector<8x128xf32>
    %87 = vector.extract_strided_slice %80 {offsets = [0, 128], sizes = [8, 128], strides = [1, 1]} : vector<8x512xf32> to vector<8x128xf32>
    %88 = arith.negf %87 : vector<8x128xf32>
    %89 = math.exp %88 : vector<8x128xf32>
    %cst_46 = arith.constant 1.000000e+00 : f32
    %90 = vector.broadcast %cst_46 : f32 to vector<8x128xf32>
    %91 = arith.addf %90, %89 : vector<8x128xf32>
    %92 = arith.divf %90, %91 : vector<8x128xf32>
    %93 = vector.extract_strided_slice %80 {offsets = [0, 256], sizes = [8, 128], strides = [1, 1]} : vector<8x512xf32> to vector<8x128xf32>
    %94 = math.tanh %93 : vector<8x128xf32>
    %95 = vector.extract_strided_slice %80 {offsets = [0, 384], sizes = [8, 128], strides = [1, 1]} : vector<8x512xf32> to vector<8x128xf32>
    %96 = arith.negf %95 : vector<8x128xf32>
    %97 = math.exp %96 : vector<8x128xf32>
    %cst_47 = arith.constant 1.000000e+00 : f32
    %98 = vector.broadcast %cst_47 : f32 to vector<8x128xf32>
    %99 = arith.addf %98, %97 : vector<8x128xf32>
    %100 = arith.divf %98, %99 : vector<8x128xf32>
    %c0_48 = arith.constant 0 : index
    %c0_49 = arith.constant 0 : index
    %101 = vector.load %arg10[%c0_48, %c0_49] : memref<8x128xf32, #tpu.memory_space<vmem>>, vector<8x128xf32>
    %102 = arith.mulf %92, %101 : vector<8x128xf32>
    %103 = arith.mulf %86, %94 : vector<8x128xf32>
    %104 = arith.addf %102, %103 : vector<8x128xf32>
    %105 = math.tanh %104 : vector<8x128xf32>
    %106 = arith.mulf %100, %105 : vector<8x128xf32>
    %c0_50 = arith.constant 0 : index
    %c0_51 = arith.constant 0 : index
    %107 = vector.load %arg10[%c0_50, %c0_51] : memref<8x128xf32, #tpu.memory_space<vmem>>, vector<8x128xf32>
    tpu.vector_store %arg10[%c0_50, %c0_51], %104 {strides = array<i32>} : memref<8x128xf32, #tpu.memory_space<vmem>>, vector<8x128xf32>,
    %c0_52 = arith.constant 0 : index
    %c0_53 = arith.constant 0 : index
    %108 = vector.load %arg9[%c0_52, %c0_53] : memref<8x128xf32, #tpu.memory_space<vmem>>, vector<8x128xf32>
    tpu.vector_store %arg9[%c0_52, %c0_53], %106 {strides = array<i32>} : memref<8x128xf32, #tpu.memory_space<vmem>>, vector<8x128xf32>,
    %c16_54 = arith.constant 16 : index
    %c0_55 = arith.constant 0 : index
    %109 = vector.load %arg5[%c16_54, %c0_55] : memref<64x128xf32, #tpu.memory_space<vmem>>, vector<8x128xf32>
    tpu.vector_store %arg5[%c16_54, %c0_55], %106 {strides = array<i32>} : memref<64x128xf32, #tpu.memory_space<vmem>>, vector<8x128xf32>,
    %c24 = arith.constant 24 : index
    %c0_56 = arith.constant 0 : index
    %110 = vector.load %arg8[%c24, %c0_56] : memref<64x512xf32, #tpu.memory_space<vmem>>, vector<8x512xf32>
    %c0_57 = arith.constant 0 : index
    %c0_58 = arith.constant 0 : index
    %111 = vector.load %arg9[%c0_57, %c0_58] : memref<8x128xf32, #tpu.memory_space<vmem>>, vector<8x128xf32>
    %cst_59 = arith.constant dense<0.000000e+00> : vector<8x512xf32>
    %112 = tpu.matmul %111, %10, %cst_59 {dimension_numbers = #tpu.dot_dimension_numbers<[1], [0], [0], [1], [0, 0, 1, 1], [], []>} : vector<8x128xf32>, vector<128x512xf32>, vector<8x512xf32> -> vector<8x512xf32>
    %113 = arith.addf %110, %112 : vector<8x512xf32>
    %114 = vector.extract_strided_slice %113 {offsets = [0, 0], sizes = [8, 128], strides = [1, 1]} : vector<8x512xf32> to vector<8x128xf32>
    %115 = arith.negf %114 : vector<8x128xf32>
    %116 = math.exp %115 : vector<8x128xf32>
    %cst_60 = arith.constant 1.000000e+00 : f32
    %117 = vector.broadcast %cst_60 : f32 to vector<8x128xf32>
    %118 = arith.addf %117, %116 : vector<8x128xf32>
    %119 = arith.divf %117, %118 : vector<8x128xf32>
    %120 = vector.extract_strided_slice %113 {offsets = [0, 128], sizes = [8, 128], strides = [1, 1]} : vector<8x512xf32> to vector<8x128xf32>
    %121 = arith.negf %120 : vector<8x128xf32>
    %122 = math.exp %121 : vector<8x128xf32>
    %cst_61 = arith.constant 1.000000e+00 : f32
    %123 = vector.broadcast %cst_61 : f32 to vector<8x128xf32>
    %124 = arith.addf %123, %122 : vector<8x128xf32>
    %125 = arith.divf %123, %124 : vector<8x128xf32>
    %126 = vector.extract_strided_slice %113 {offsets = [0, 256], sizes = [8, 128], strides = [1, 1]} : vector<8x512xf32> to vector<8x128xf32>
    %127 = math.tanh %126 : vector<8x128xf32>
    %128 = vector.extract_strided_slice %113 {offsets = [0, 384], sizes = [8, 128], strides = [1, 1]} : vector<8x512xf32> to vector<8x128xf32>
    %129 = arith.negf %128 : vector<8x128xf32>
    %130 = math.exp %129 : vector<8x128xf32>
    %cst_62 = arith.constant 1.000000e+00 : f32
    %131 = vector.broadcast %cst_62 : f32 to vector<8x128xf32>
    %132 = arith.addf %131, %130 : vector<8x128xf32>
    %133 = arith.divf %131, %132 : vector<8x128xf32>
    %c0_63 = arith.constant 0 : index
    %c0_64 = arith.constant 0 : index
    %134 = vector.load %arg10[%c0_63, %c0_64] : memref<8x128xf32, #tpu.memory_space<vmem>>, vector<8x128xf32>
    %135 = arith.mulf %125, %134 : vector<8x128xf32>
    %136 = arith.mulf %119, %127 : vector<8x128xf32>
    %137 = arith.addf %135, %136 : vector<8x128xf32>
    %138 = math.tanh %137 : vector<8x128xf32>
    %139 = arith.mulf %133, %138 : vector<8x128xf32>
    %c0_65 = arith.constant 0 : index
    %c0_66 = arith.constant 0 : index
    %140 = vector.load %arg10[%c0_65, %c0_66] : memref<8x128xf32, #tpu.memory_space<vmem>>, vector<8x128xf32>
    tpu.vector_store %arg10[%c0_65, %c0_66], %137 {strides = array<i32>} : memref<8x128xf32, #tpu.memory_space<vmem>>, vector<8x128xf32>,
    %c0_67 = arith.constant 0 : index
    %c0_68 = arith.constant 0 : index
    %141 = vector.load %arg9[%c0_67, %c0_68] : memref<8x128xf32, #tpu.memory_space<vmem>>, vector<8x128xf32>
    tpu.vector_store %arg9[%c0_67, %c0_68], %139 {strides = array<i32>} : memref<8x128xf32, #tpu.memory_space<vmem>>, vector<8x128xf32>,
    %c24_69 = arith.constant 24 : index
    %c0_70 = arith.constant 0 : index
    %142 = vector.load %arg5[%c24_69, %c0_70] : memref<64x128xf32, #tpu.memory_space<vmem>>, vector<8x128xf32>
    tpu.vector_store %arg5[%c24_69, %c0_70], %139 {strides = array<i32>} : memref<64x128xf32, #tpu.memory_space<vmem>>, vector<8x128xf32>,
    %c32 = arith.constant 32 : index
    %c0_71 = arith.constant 0 : index
    %143 = vector.load %arg8[%c32, %c0_71] : memref<64x512xf32, #tpu.memory_space<vmem>>, vector<8x512xf32>
    %c0_72 = arith.constant 0 : index
    %c0_73 = arith.constant 0 : index
    %144 = vector.load %arg9[%c0_72, %c0_73] : memref<8x128xf32, #tpu.memory_space<vmem>>, vector<8x128xf32>
    %cst_74 = arith.constant dense<0.000000e+00> : vector<8x512xf32>
    %145 = tpu.matmul %144, %10, %cst_74 {dimension_numbers = #tpu.dot_dimension_numbers<[1], [0], [0], [1], [0, 0, 1, 1], [], []>} : vector<8x128xf32>, vector<128x512xf32>, vector<8x512xf32> -> vector<8x512xf32>
    %146 = arith.addf %143, %145 : vector<8x512xf32>
    %147 = vector.extract_strided_slice %146 {offsets = [0, 0], sizes = [8, 128], strides = [1, 1]} : vector<8x512xf32> to vector<8x128xf32>
    %148 = arith.negf %147 : vector<8x128xf32>
    %149 = math.exp %148 : vector<8x128xf32>
    %cst_75 = arith.constant 1.000000e+00 : f32
    %150 = vector.broadcast %cst_75 : f32 to vector<8x128xf32>
    %151 = arith.addf %150, %149 : vector<8x128xf32>
    %152 = arith.divf %150, %151 : vector<8x128xf32>
    %153 = vector.extract_strided_slice %146 {offsets = [0, 128], sizes = [8, 128], strides = [1, 1]} : vector<8x512xf32> to vector<8x128xf32>
    %154 = arith.negf %153 : vector<8x128xf32>
    %155 = math.exp %154 : vector<8x128xf32>
    %cst_76 = arith.constant 1.000000e+00 : f32
    %156 = vector.broadcast %cst_76 : f32 to vector<8x128xf32>
    %157 = arith.addf %156, %155 : vector<8x128xf32>
    %158 = arith.divf %156, %157 : vector<8x128xf32>
    %159 = vector.extract_strided_slice %146 {offsets = [0, 256], sizes = [8, 128], strides = [1, 1]} : vector<8x512xf32> to vector<8x128xf32>
    %160 = math.tanh %159 : vector<8x128xf32>
    %161 = vector.extract_strided_slice %146 {offsets = [0, 384], sizes = [8, 128], strides = [1, 1]} : vector<8x512xf32> to vector<8x128xf32>
    %162 = arith.negf %161 : vector<8x128xf32>
    %163 = math.exp %162 : vector<8x128xf32>
    %cst_77 = arith.constant 1.000000e+00 : f32
    %164 = vector.broadcast %cst_77 : f32 to vector<8x128xf32>
    %165 = arith.addf %164, %163 : vector<8x128xf32>
    %166 = arith.divf %164, %165 : vector<8x128xf32>
    %c0_78 = arith.constant 0 : index
    %c0_79 = arith.constant 0 : index
    %167 = vector.load %arg10[%c0_78, %c0_79] : memref<8x128xf32, #tpu.memory_space<vmem>>, vector<8x128xf32>
    %168 = arith.mulf %158, %167 : vector<8x128xf32>
    %169 = arith.mulf %152, %160 : vector<8x128xf32>
    %170 = arith.addf %168, %169 : vector<8x128xf32>
    %171 = math.tanh %170 : vector<8x128xf32>
    %172 = arith.mulf %166, %171 : vector<8x128xf32>
    %c0_80 = arith.constant 0 : index
    %c0_81 = arith.constant 0 : index
    %173 = vector.load %arg10[%c0_80, %c0_81] : memref<8x128xf32, #tpu.memory_space<vmem>>, vector<8x128xf32>
    tpu.vector_store %arg10[%c0_80, %c0_81], %170 {strides = array<i32>} : memref<8x128xf32, #tpu.memory_space<vmem>>, vector<8x128xf32>,
    %c0_82 = arith.constant 0 : index
    %c0_83 = arith.constant 0 : index
    %174 = vector.load %arg9[%c0_82, %c0_83] : memref<8x128xf32, #tpu.memory_space<vmem>>, vector<8x128xf32>
    tpu.vector_store %arg9[%c0_82, %c0_83], %172 {strides = array<i32>} : memref<8x128xf32, #tpu.memory_space<vmem>>, vector<8x128xf32>,
    %c32_84 = arith.constant 32 : index
    %c0_85 = arith.constant 0 : index
    %175 = vector.load %arg5[%c32_84, %c0_85] : memref<64x128xf32, #tpu.memory_space<vmem>>, vector<8x128xf32>
    tpu.vector_store %arg5[%c32_84, %c0_85], %172 {strides = array<i32>} : memref<64x128xf32, #tpu.memory_space<vmem>>, vector<8x128xf32>,
    %c40 = arith.constant 40 : index
    %c0_86 = arith.constant 0 : index
    %176 = vector.load %arg8[%c40, %c0_86] : memref<64x512xf32, #tpu.memory_space<vmem>>, vector<8x512xf32>
    %c0_87 = arith.constant 0 : index
    %c0_88 = arith.constant 0 : index
    %177 = vector.load %arg9[%c0_87, %c0_88] : memref<8x128xf32, #tpu.memory_space<vmem>>, vector<8x128xf32>
    %cst_89 = arith.constant dense<0.000000e+00> : vector<8x512xf32>
    %178 = tpu.matmul %177, %10, %cst_89 {dimension_numbers = #tpu.dot_dimension_numbers<[1], [0], [0], [1], [0, 0, 1, 1], [], []>} : vector<8x128xf32>, vector<128x512xf32>, vector<8x512xf32> -> vector<8x512xf32>
    %179 = arith.addf %176, %178 : vector<8x512xf32>
    %180 = vector.extract_strided_slice %179 {offsets = [0, 0], sizes = [8, 128], strides = [1, 1]} : vector<8x512xf32> to vector<8x128xf32>
    %181 = arith.negf %180 : vector<8x128xf32>
    %182 = math.exp %181 : vector<8x128xf32>
    %cst_90 = arith.constant 1.000000e+00 : f32
    %183 = vector.broadcast %cst_90 : f32 to vector<8x128xf32>
    %184 = arith.addf %183, %182 : vector<8x128xf32>
    %185 = arith.divf %183, %184 : vector<8x128xf32>
    %186 = vector.extract_strided_slice %179 {offsets = [0, 128], sizes = [8, 128], strides = [1, 1]} : vector<8x512xf32> to vector<8x128xf32>
    %187 = arith.negf %186 : vector<8x128xf32>
    %188 = math.exp %187 : vector<8x128xf32>
    %cst_91 = arith.constant 1.000000e+00 : f32
    %189 = vector.broadcast %cst_91 : f32 to vector<8x128xf32>
    %190 = arith.addf %189, %188 : vector<8x128xf32>
    %191 = arith.divf %189, %190 : vector<8x128xf32>
    %192 = vector.extract_strided_slice %179 {offsets = [0, 256], sizes = [8, 128], strides = [1, 1]} : vector<8x512xf32> to vector<8x128xf32>
    %193 = math.tanh %192 : vector<8x128xf32>
    %194 = vector.extract_strided_slice %179 {offsets = [0, 384], sizes = [8, 128], strides = [1, 1]} : vector<8x512xf32> to vector<8x128xf32>
    %195 = arith.negf %194 : vector<8x128xf32>
    %196 = math.exp %195 : vector<8x128xf32>
    %cst_92 = arith.constant 1.000000e+00 : f32
    %197 = vector.broadcast %cst_92 : f32 to vector<8x128xf32>
    %198 = arith.addf %197, %196 : vector<8x128xf32>
    %199 = arith.divf %197, %198 : vector<8x128xf32>
    %c0_93 = arith.constant 0 : index
    %c0_94 = arith.constant 0 : index
    %200 = vector.load %arg10[%c0_93, %c0_94] : memref<8x128xf32, #tpu.memory_space<vmem>>, vector<8x128xf32>
    %201 = arith.mulf %191, %200 : vector<8x128xf32>
    %202 = arith.mulf %185, %193 : vector<8x128xf32>
    %203 = arith.addf %201, %202 : vector<8x128xf32>
    %204 = math.tanh %203 : vector<8x128xf32>
    %205 = arith.mulf %199, %204 : vector<8x128xf32>
    %c0_95 = arith.constant 0 : index
    %c0_96 = arith.constant 0 : index
    %206 = vector.load %arg10[%c0_95, %c0_96] : memref<8x128xf32, #tpu.memory_space<vmem>>, vector<8x128xf32>
    tpu.vector_store %arg10[%c0_95, %c0_96], %203 {strides = array<i32>} : memref<8x128xf32, #tpu.memory_space<vmem>>, vector<8x128xf32>,
    %c0_97 = arith.constant 0 : index
    %c0_98 = arith.constant 0 : index
    %207 = vector.load %arg9[%c0_97, %c0_98] : memref<8x128xf32, #tpu.memory_space<vmem>>, vector<8x128xf32>
    tpu.vector_store %arg9[%c0_97, %c0_98], %205 {strides = array<i32>} : memref<8x128xf32, #tpu.memory_space<vmem>>, vector<8x128xf32>,
    %c40_99 = arith.constant 40 : index
    %c0_100 = arith.constant 0 : index
    %208 = vector.load %arg5[%c40_99, %c0_100] : memref<64x128xf32, #tpu.memory_space<vmem>>, vector<8x128xf32>
    tpu.vector_store %arg5[%c40_99, %c0_100], %205 {strides = array<i32>} : memref<64x128xf32, #tpu.memory_space<vmem>>, vector<8x128xf32>,
    %c48 = arith.constant 48 : index
    %c0_101 = arith.constant 0 : index
    %209 = vector.load %arg8[%c48, %c0_101] : memref<64x512xf32, #tpu.memory_space<vmem>>, vector<8x512xf32>
    %c0_102 = arith.constant 0 : index
    %c0_103 = arith.constant 0 : index
    %210 = vector.load %arg9[%c0_102, %c0_103] : memref<8x128xf32, #tpu.memory_space<vmem>>, vector<8x128xf32>
    %cst_104 = arith.constant dense<0.000000e+00> : vector<8x512xf32>
    %211 = tpu.matmul %210, %10, %cst_104 {dimension_numbers = #tpu.dot_dimension_numbers<[1], [0], [0], [1], [0, 0, 1, 1], [], []>} : vector<8x128xf32>, vector<128x512xf32>, vector<8x512xf32> -> vector<8x512xf32>
    %212 = arith.addf %209, %211 : vector<8x512xf32>
    %213 = vector.extract_strided_slice %212 {offsets = [0, 0], sizes = [8, 128], strides = [1, 1]} : vector<8x512xf32> to vector<8x128xf32>
    %214 = arith.negf %213 : vector<8x128xf32>
    %215 = math.exp %214 : vector<8x128xf32>
    %cst_105 = arith.constant 1.000000e+00 : f32
    %216 = vector.broadcast %cst_105 : f32 to vector<8x128xf32>
    %217 = arith.addf %216, %215 : vector<8x128xf32>
    %218 = arith.divf %216, %217 : vector<8x128xf32>
    %219 = vector.extract_strided_slice %212 {offsets = [0, 128], sizes = [8, 128], strides = [1, 1]} : vector<8x512xf32> to vector<8x128xf32>
    %220 = arith.negf %219 : vector<8x128xf32>
    %221 = math.exp %220 : vector<8x128xf32>
    %cst_106 = arith.constant 1.000000e+00 : f32
    %222 = vector.broadcast %cst_106 : f32 to vector<8x128xf32>
    %223 = arith.addf %222, %221 : vector<8x128xf32>
    %224 = arith.divf %222, %223 : vector<8x128xf32>
    %225 = vector.extract_strided_slice %212 {offsets = [0, 256], sizes = [8, 128], strides = [1, 1]} : vector<8x512xf32> to vector<8x128xf32>
    %226 = math.tanh %225 : vector<8x128xf32>
    %227 = vector.extract_strided_slice %212 {offsets = [0, 384], sizes = [8, 128], strides = [1, 1]} : vector<8x512xf32> to vector<8x128xf32>
    %228 = arith.negf %227 : vector<8x128xf32>
    %229 = math.exp %228 : vector<8x128xf32>
    %cst_107 = arith.constant 1.000000e+00 : f32
    %230 = vector.broadcast %cst_107 : f32 to vector<8x128xf32>
    %231 = arith.addf %230, %229 : vector<8x128xf32>
    %232 = arith.divf %230, %231 : vector<8x128xf32>
    %c0_108 = arith.constant 0 : index
    %c0_109 = arith.constant 0 : index
    %233 = vector.load %arg10[%c0_108, %c0_109] : memref<8x128xf32, #tpu.memory_space<vmem>>, vector<8x128xf32>
    %234 = arith.mulf %224, %233 : vector<8x128xf32>
    %235 = arith.mulf %218, %226 : vector<8x128xf32>
    %236 = arith.addf %234, %235 : vector<8x128xf32>
    %237 = math.tanh %236 : vector<8x128xf32>
    %238 = arith.mulf %232, %237 : vector<8x128xf32>
    %c0_110 = arith.constant 0 : index
    %c0_111 = arith.constant 0 : index
    %239 = vector.load %arg10[%c0_110, %c0_111] : memref<8x128xf32, #tpu.memory_space<vmem>>, vector<8x128xf32>
    tpu.vector_store %arg10[%c0_110, %c0_111], %236 {strides = array<i32>} : memref<8x128xf32, #tpu.memory_space<vmem>>, vector<8x128xf32>,
    %c0_112 = arith.constant 0 : index
    %c0_113 = arith.constant 0 : index
    %240 = vector.load %arg9[%c0_112, %c0_113] : memref<8x128xf32, #tpu.memory_space<vmem>>, vector<8x128xf32>
    tpu.vector_store %arg9[%c0_112, %c0_113], %238 {strides = array<i32>} : memref<8x128xf32, #tpu.memory_space<vmem>>, vector<8x128xf32>,
    %c48_114 = arith.constant 48 : index
    %c0_115 = arith.constant 0 : index
    %241 = vector.load %arg5[%c48_114, %c0_115] : memref<64x128xf32, #tpu.memory_space<vmem>>, vector<8x128xf32>
    tpu.vector_store %arg5[%c48_114, %c0_115], %238 {strides = array<i32>} : memref<64x128xf32, #tpu.memory_space<vmem>>, vector<8x128xf32>,
    %c56 = arith.constant 56 : index
    %c0_116 = arith.constant 0 : index
    %242 = vector.load %arg8[%c56, %c0_116] : memref<64x512xf32, #tpu.memory_space<vmem>>, vector<8x512xf32>
    %c0_117 = arith.constant 0 : index
    %c0_118 = arith.constant 0 : index
    %243 = vector.load %arg9[%c0_117, %c0_118] : memref<8x128xf32, #tpu.memory_space<vmem>>, vector<8x128xf32>
    %cst_119 = arith.constant dense<0.000000e+00> : vector<8x512xf32>
    %244 = tpu.matmul %243, %10, %cst_119 {dimension_numbers = #tpu.dot_dimension_numbers<[1], [0], [0], [1], [0, 0, 1, 1], [], []>} : vector<8x128xf32>, vector<128x512xf32>, vector<8x512xf32> -> vector<8x512xf32>
    %245 = arith.addf %242, %244 : vector<8x512xf32>
    %246 = vector.extract_strided_slice %245 {offsets = [0, 0], sizes = [8, 128], strides = [1, 1]} : vector<8x512xf32> to vector<8x128xf32>
    %247 = arith.negf %246 : vector<8x128xf32>
    %248 = math.exp %247 : vector<8x128xf32>
    %cst_120 = arith.constant 1.000000e+00 : f32
    %249 = vector.broadcast %cst_120 : f32 to vector<8x128xf32>
    %250 = arith.addf %249, %248 : vector<8x128xf32>
    %251 = arith.divf %249, %250 : vector<8x128xf32>
    %252 = vector.extract_strided_slice %245 {offsets = [0, 128], sizes = [8, 128], strides = [1, 1]} : vector<8x512xf32> to vector<8x128xf32>
    %253 = arith.negf %252 : vector<8x128xf32>
    %254 = math.exp %253 : vector<8x128xf32>
    %cst_121 = arith.constant 1.000000e+00 : f32
    %255 = vector.broadcast %cst_121 : f32 to vector<8x128xf32>
    %256 = arith.addf %255, %254 : vector<8x128xf32>
    %257 = arith.divf %255, %256 : vector<8x128xf32>
    %258 = vector.extract_strided_slice %245 {offsets = [0, 256], sizes = [8, 128], strides = [1, 1]} : vector<8x512xf32> to vector<8x128xf32>
    %259 = math.tanh %258 : vector<8x128xf32>
    %260 = vector.extract_strided_slice %245 {offsets = [0, 384], sizes = [8, 128], strides = [1, 1]} : vector<8x512xf32> to vector<8x128xf32>
    %261 = arith.negf %260 : vector<8x128xf32>
    %262 = math.exp %261 : vector<8x128xf32>
    %cst_122 = arith.constant 1.000000e+00 : f32
    %263 = vector.broadcast %cst_122 : f32 to vector<8x128xf32>
    %264 = arith.addf %263, %262 : vector<8x128xf32>
    %265 = arith.divf %263, %264 : vector<8x128xf32>
    %c0_123 = arith.constant 0 : index
    %c0_124 = arith.constant 0 : index
    %266 = vector.load %arg10[%c0_123, %c0_124] : memref<8x128xf32, #tpu.memory_space<vmem>>, vector<8x128xf32>
    %267 = arith.mulf %257, %266 : vector<8x128xf32>
    %268 = arith.mulf %251, %259 : vector<8x128xf32>
    %269 = arith.addf %267, %268 : vector<8x128xf32>
    %270 = math.tanh %269 : vector<8x128xf32>
    %271 = arith.mulf %265, %270 : vector<8x128xf32>
    %c0_125 = arith.constant 0 : index
    %c0_126 = arith.constant 0 : index
    %272 = vector.load %arg10[%c0_125, %c0_126] : memref<8x128xf32, #tpu.memory_space<vmem>>, vector<8x128xf32>
    tpu.vector_store %arg10[%c0_125, %c0_126], %269 {strides = array<i32>} : memref<8x128xf32, #tpu.memory_space<vmem>>, vector<8x128xf32>,
    %c0_127 = arith.constant 0 : index
    %c0_128 = arith.constant 0 : index
    %273 = vector.load %arg9[%c0_127, %c0_128] : memref<8x128xf32, #tpu.memory_space<vmem>>, vector<8x128xf32>
    tpu.vector_store %arg9[%c0_127, %c0_128], %271 {strides = array<i32>} : memref<8x128xf32, #tpu.memory_space<vmem>>, vector<8x128xf32>,
    %c56_129 = arith.constant 56 : index
    %c0_130 = arith.constant 0 : index
    %274 = vector.load %arg5[%c56_129, %c0_130] : memref<64x128xf32, #tpu.memory_space<vmem>>, vector<8x128xf32>
    tpu.vector_store %arg5[%c56_129, %c0_130], %271 {strides = array<i32>} : memref<64x128xf32, #tpu.memory_space<vmem>>, vector<8x128xf32>,
    %c0_i32_131 = arith.constant 0 : i32
    %275 = arith.cmpi eq, %arg0, %c0_i32_131 : i32
    %276 = arith.extui %275 : i1 to i32
    %c0_i32_132 = arith.constant 0 : i32
    %277 = arith.cmpi ne, %276, %c0_i32_132 : i32
    scf.if %277 {
      %c0_133 = arith.constant 0 : index
      %c0_134 = arith.constant 0 : index
      %278 = vector.load %arg9[%c0_133, %c0_134] : memref<8x128xf32, #tpu.memory_space<vmem>>, vector<8x128xf32>
      %c0_135 = arith.constant 0 : index
      %c0_136 = arith.constant 0 : index
      %279 = vector.load %arg6[%c0_135, %c0_136] : memref<8x128xf32, #tpu.memory_space<vmem>>, vector<8x128xf32>
      tpu.vector_store %arg6[%c0_135, %c0_136], %278 {strides = array<i32>} : memref<8x128xf32, #tpu.memory_space<vmem>>, vector<8x128xf32>,
      %c0_137 = arith.constant 0 : index
      %c0_138 = arith.constant 0 : index
      %280 = vector.load %arg10[%c0_137, %c0_138] : memref<8x128xf32, #tpu.memory_space<vmem>>, vector<8x128xf32>
      %c0_139 = arith.constant 0 : index
      %c0_140 = arith.constant 0 : index
      %281 = vector.load %arg7[%c0_139, %c0_140] : memref<8x128xf32, #tpu.memory_space<vmem>>, vector<8x128xf32>
      tpu.vector_store %arg7[%c0_139, %c0_140], %280 {strides = array<i32>} : memref<8x128xf32, #tpu.memory_space<vmem>>, vector<8x128xf32>,
    } else {
    }
    return
  }
  func.func @transform_0(%arg0: i32) -> (i32, i32) {
    %c0_i32 = arith.constant 0 : i32
    %c0_i32_0 = arith.constant 0 : i32
    return %arg0, %c0_i32 : i32, i32
  }
  func.func @transform_1(%arg0: i32) -> (i32, i32) {
    %c0_i32 = arith.constant 0 : i32
    %c0_i32_0 = arith.constant 0 : i32
    %c0_i32_1 = arith.constant 0 : i32
    return %c0_i32, %c0_i32_0 : i32, i32
  }
  func.func @transform_2(%arg0: i32) -> (i32, i32) {
    %c0_i32 = arith.constant 0 : i32
    %c0_i32_0 = arith.constant 0 : i32
    %c0_i32_1 = arith.constant 0 : i32
    return %c0_i32, %c0_i32_0 : i32, i32
  }
  func.func @transform_3(%arg0: i32) -> (i32, i32) {
    %c0_i32 = arith.constant 0 : i32
    %c0_i32_0 = arith.constant 0 : i32
    %c0_i32_1 = arith.constant 0 : i32
    return %c0_i32, %c0_i32_0 : i32, i32
  }
  func.func @transform_4(%arg0: i32) -> (i32, i32) {
    %c0_i32 = arith.constant 0 : i32
    %c0_i32_0 = arith.constant 0 : i32
    return %arg0, %c0_i32 : i32, i32
  }
  func.func @transform_5(%arg0: i32) -> (i32, i32) {
    %c0_i32 = arith.constant 0 : i32
    %c0_i32_0 = arith.constant 0 : i32
    %c0_i32_1 = arith.constant 0 : i32
    return %c0_i32, %c0_i32_0 : i32, i32
  }
  func.func @transform_6(%arg0: i32) -> (i32, i32) {
    %c0_i32 = arith.constant 0 : i32
    %c0_i32_0 = arith.constant 0 : i32
    %c0_i32_1 = arith.constant 0 : i32
    return %c0_i32, %c0_i32_0 : i32, i32
  }
}

</mosaic_0001>

<llo_original>
// kernel: tpu_custom_call.1
$region0: #{tpu_custom_call.1}
  #allocation0 [shape = 'u32[]', space=smem, size = 0x4, offset = 0x4, fixed_abs, tag = 'smem constant byte address 0x4 - core index']
  #allocation1 [shape = 'u32[72,128]{1,0:T(1,128)}', space=vmem, size = 0x9000, scoped, tag = 'internal scratch']
  #allocation2 [shape = 'f32[64,512]{1,0:T(8,128)}', space=vmem, size = 0x20000, scoped, tag = 'scratch operand']
  #allocation3 [shape = 'f32[8,128]{1,0:T(8,128)}', space=vmem, size = 0x1000, scoped, tag = 'scratch operand']
  #allocation4 [shape = 'f32[8,128]{1,0:T(8,128)}', space=vmem, size = 0x1000, scoped, tag = 'scratch operand']
  %s0 = inlined_call_operand.vmem [shape: f32[64,4], index: 0, kind: input, shape index: {}]
  %s1 = inlined_call_operand.vmem [shape: f32[4,512], index: 1, kind: input, shape index: {}]
  %s2 = inlined_call_operand.hbm [shape: f32[128,512], index: 2, kind: input, shape index: {}]
  %s3 = inlined_call_operand.vmem [shape: f32[1,512], index: 3, kind: input, shape index: {}]
  %s4 = inlined_call_operand.hbm [shape: f32[64,128], index: 4, kind: output, shape index: {0}]
  %s5 = inlined_call_operand.hbm [shape: f32[8,128], index: 5, kind: output, shape index: {1}]
  %s6 = inlined_call_operand.hbm [shape: f32[8,128], index: 6, kind: output, shape index: {2}]
  %7 = xla_tuple %s4, %s5, %s6
  %s8 = sld [smem:[#allocation0]]
  $region54: #{tpu_custom_call.1} parent=0
    _
  %s10 = ssub.s32 1, %s8
  %s11 = scalar_select 0, %s10, %s8
  $region1: #{tpu_custom_call.1} parent=0
    #allocation5 [shape = 'u8[262144]{0}', space=vmem, size = 0x40000, scoped, tag = 'input window, operand 2, single buffered']
    #allocation6 [shape = 's32[1]{0}', space=sflag, size = 0x4, scoped, tag = 'scoped memory for tpu_custom_call.1']
    #allocation7 [shape = 's32[1]{0}', space=sflag, size = 0x4, scoped, tag = 'scoped memory for tpu_custom_call.1']
    #allocation8 [shape = 'u8[32768]{0}', space=vmem, size = 0x8000, scoped, tag = 'output window, operand 0, single buffered']
    #allocation9 [shape = 'u8[4096]{0}', space=vmem, size = 0x1000, scoped, tag = 'output window, operand 1, single buffered']
    #allocation10 [shape = 's32[1]{0}', space=sflag, size = 0x4, scoped, tag = 'scoped memory for tpu_custom_call.1']
    #allocation11 [shape = 'u8[4096]{0}', space=vmem, size = 0x1000, scoped, tag = 'output window, operand 2, single buffered']
    %12 = vsyncpa [#allocation6], 0
    %13 = vsyncpa [#allocation7], 0
    %14 = vsyncpa [#allocation10], 0
    // Predicated region
    $region2: #{tpu_custom_call.1} parent=1 // pred_check
      _
    $region3: #{tpu_custom_call.1} parent=1 // pred_check_branch
      %16 = sbr.rel (0) target = $region5
    $region4: #{tpu_custom_call.1} parent=1 // pred_region
      _
    $region5: #{tpu_custom_call.1} parent=1 // pred_fallthru
      _
    // Predicated region
    $region6: #{tpu_custom_call.1} parent=1 // pred_check
      _
    $region7: #{tpu_custom_call.1} parent=1 // pred_check_branch
      %18 = sbr.rel (0) target = $region9
    $region8: #{tpu_custom_call.1} parent=1 // pred_region
      _
    $region9: #{tpu_custom_call.1} parent=1 // pred_fallthru
      _
    // Predicated region
    $region10: #{tpu_custom_call.1} parent=1 // pred_check
      _
    $region11: #{tpu_custom_call.1} parent=1 // pred_check_branch
      %20 = sbr.rel (0) target = $region13
    $region12: #{tpu_custom_call.1} parent=1 // pred_region
      %22 = vsyncadd [#allocation6], 0
      %s23 = sshll.u32 %s2, 4
      %s24 = int_to_ptr.hbm [resolvable:$true] %s23
      %s25 = sshll.u32 [#allocation5], 4
      %s26 = int_to_ptr.vmem [resolvable:$true] %s25
      %31 = dma.hbm_to_vmem [thread:$0]  %s24, 8192, %s26, [#allocation6], 512, 512, 32
    $region13: #{tpu_custom_call.1} parent=1 // pred_fallthru
      _
    // Predicated region
    $region14: #{tpu_custom_call.1} parent=1 // pred_check
      _
    $region15: #{tpu_custom_call.1} parent=1 // pred_check_branch
      %33 = sbr.rel (0) target = $region17
    $region16: #{tpu_custom_call.1} parent=1 // pred_region
      _
    $region17: #{tpu_custom_call.1} parent=1 // pred_fallthru
      _
    // Predicated region
    $region18: #{tpu_custom_call.1} parent=1 // pred_check
      _
    $region19: #{tpu_custom_call.1} parent=1 // pred_check_branch
      %35 = sbr.rel (0) target = $region21
    $region20: #{tpu_custom_call.1} parent=1 // pred_region
      %37 = dma.done [#allocation6], 8192
    $region21: #{tpu_custom_call.1} parent=1 // pred_fallthru
      _
    %p38 = scmp.eq.s32.totalorder 0, 0
    // Predicated region
    $region22: #{tpu_custom_call.1} parent=1 // pred_check
      %p39 = pneg %p38
    $region23: #{tpu_custom_call.1} parent=1 // pred_check_branch
      %41 = sbr.rel (%p39) target = $region25
    $region24: #{tpu_custom_call.1} parent=1 // pred_region
      %42 = vst [vmem:[#allocation3] sm:$0xff] 0.0
      %43 = vst [vmem:[#allocation4] sm:$0xff] 0.0
      %44 = vst [vmem:[#allocation9] sm:$0xff] 0.0
      %45 = vst [vmem:[#allocation11] sm:$0xff] 0.0
    $region25: #{tpu_custom_call.1} parent=1 // pred_fallthru
      _
    %v46 = vld [vmem:[%s0] sm:$0xff]
    %v47 = vld [vmem:[%s0 + $0x8] sm:$0xff]
    %v48 = vld [vmem:[%s0 + $0x10] sm:$0xff]
    %v49 = vld [vmem:[%s0 + $0x18] sm:$0xff]
    %v50 = vld [vmem:[%s0 + $0x20] sm:$0xff]
    %v51 = vld [vmem:[%s0 + $0x28] sm:$0xff]
    %v52 = vld [vmem:[%s0 + $0x30] sm:$0xff]
    %v53 = vld [vmem:[%s0 + $0x38] sm:$0xff]
    %v54 = vld [vmem:[%s1] sm:$0xff]
    %v55 = vld [vmem:[%s1 + $0x8] sm:$0xff]
    %v56 = vld [vmem:[%s3] sm:$0xf]
    %v58 = vperm.slane %v56, 0
    %v59 = vperm.slane %v56, 1
    %v60 = vperm.slane %v56, 2
    %v61 = vperm.slane %v56, 3
    %68 = vst [vmem:[#allocation1] ss:$2 sm:$0xff] %v54
    %s69 = scalar_lea.vmem [#allocation1], 16
    %70 = vst [vmem:[%s69] ss:$2 sm:$0xff] %v55
    %v71 = vld.sshfl [vmem:[#allocation1] sm:$0xff pattern:$0x75316420]
    %v72 = vld.sshfl [vmem:[#allocation1 + $0x8] sm:$0xff pattern:$0x75316420]
    %v73 = vld.sshfl [vmem:[#allocation1 + $0x10] sm:$0xff pattern:$0x75316420]
    %v74 = vld.sshfl [vmem:[#allocation1 + $0x18] sm:$0xff pattern:$0x75316420]
    %vm75 = vcmask 31744
    %v77 = vsel %vm75, %v46, 0
    %v80 = vsel %vm75, %v47, 0
    %v83 = vsel %vm75, %v48, 0
    %v86 = vsel %vm75, %v49, 0
    %v89 = vsel %vm75, %v50, 0
    %v92 = vsel %vm75, %v51, 0
    %v95 = vsel %vm75, %v52, 0
    %v98 = vsel %vm75, %v53, 0
    %vm100 = vcmask 1043456
    %v101 = vsel %vm100, %v71, 0
    %v103 = vsel %vm100, %v72, 0
    %v105 = vsel %vm100, %v73, 0
    %v107 = vsel %vm100, %v74, 0
    %109 = vmatpush.msra.mxu0 0.0
    %110 = vmatpush.msra.mxu0 0.0
    %111 = vmatpush.msra.mxu0 0.0
    %112 = vmatpush.msra.mxu0 0.0
    %113 = vmatpush.msra.mxu0 0.0
    %114 = vmatpush.msra.mxu0 0.0
    %115 = vmatpush.msra.mxu0 0.0
    %116 = vmatpush.msra.mxu0 0.0
    %117 = vmatpush.msra.mxu0 0.0
    %118 = vmatpush.msra.mxu0 0.0
    %119 = vmatpush.msra.mxu0 0.0
    %120 = vmatpush.msra.mxu0 0.0
    %121 = vmatpush.msra.mxu0 0.0
    %122 = vmatpush.msra.mxu0 0.0
    %123 = vmatpush.msra.mxu0 0.0
    %124 = vmatpush.msra.mxu0 %v101
    %125 = vmatmul.f32.gmra.mxu0 %v77
    %v126 = vpop.f32.mrf.mxu0
    %v127 = vadd.f32 %v58, %v126
    %128 = vmatmul.f32.gmra.mxu0 %v80
    %v129 = vpop.f32.mrf.mxu0
    %v130 = vadd.f32 %v58, %v129
    %131 = vmatmul.f32.gmra.mxu0 %v83
    %v132 = vpop.f32.mrf.mxu0
    %v133 = vadd.f32 %v58, %v132
    %134 = vmatmul.f32.gmra.mxu0 %v86
    %v135 = vpop.f32.mrf.mxu0
    %v136 = vadd.f32 %v58, %v135
    %137 = vmatmul.f32.gmra.mxu0 %v89
    %v138 = vpop.f32.mrf.mxu0
    %v139 = vadd.f32 %v58, %v138
    %140 = vmatmul.f32.gmra.mxu0 %v92
    %v141 = vpop.f32.mrf.mxu0
    %v142 = vadd.f32 %v58, %v141
    %143 = vmatmul.f32.gmra.mxu0 %v95
    %v144 = vpop.f32.mrf.mxu0
    %v145 = vadd.f32 %v58, %v144
    %146 = vmatmul.f32.gmra.mxu0 %v98
    %v147 = vpop.f32.mrf.mxu0
    %v148 = vadd.f32 %v58, %v147
    %149 = vdwg.mxu0
    %150 = vmatpush.msra.mxu0 0.0
    %151 = vmatpush.msra.mxu0 0.0
    %152 = vmatpush.msra.mxu0 0.0
    %153 = vmatpush.msra.mxu0 0.0
    %154 = vmatpush.msra.mxu0 0.0
    %155 = vmatpush.msra.mxu0 0.0
    %156 = vmatpush.msra.mxu0 0.0
    %157 = vmatpush.msra.mxu0 0.0
    %158 = vmatpush.msra.mxu0 0.0
    %159 = vmatpush.msra.mxu0 0.0
    %160 = vmatpush.msra.mxu0 0.0
    %161 = vmatpush.msra.mxu0 0.0
    %162 = vmatpush.msra.mxu0 0.0
    %163 = vmatpush.msra.mxu0 0.0
    %164 = vmatpush.msra.mxu0 0.0
    %165 = vmatpush.msra.mxu0 %v103
    %166 = vmatmul.f32.gmra.mxu0 %v77
    %v167 = vpop.f32.mrf.mxu0
    %v168 = vadd.f32 %v59, %v167
    %169 = vmatmul.f32.gmra.mxu0 %v80
    %v170 = vpop.f32.mrf.mxu0
    %v171 = vadd.f32 %v59, %v170
    %172 = vmatmul.f32.gmra.mxu0 %v83
    %v173 = vpop.f32.mrf.mxu0
    %v174 = vadd.f32 %v59, %v173
    %175 = vmatmul.f32.gmra.mxu0 %v86
    %v176 = vpop.f32.mrf.mxu0
    %v177 = vadd.f32 %v59, %v176
    %178 = vmatmul.f32.gmra.mxu0 %v89
    %v179 = vpop.f32.mrf.mxu0
    %v180 = vadd.f32 %v59, %v179
    %181 = vmatmul.f32.gmra.mxu0 %v92
    %v182 = vpop.f32.mrf.mxu0
    %v183 = vadd.f32 %v59, %v182
    %184 = vmatmul.f32.gmra.mxu0 %v95
    %v185 = vpop.f32.mrf.mxu0
    %v186 = vadd.f32 %v59, %v185
    %187 = vmatmul.f32.gmra.mxu0 %v98
    %v188 = vpop.f32.mrf.mxu0
    %v189 = vadd.f32 %v59, %v188
    %190 = vdwg.mxu0
    %191 = vmatpush.msra.mxu0 0.0
    %192 = vmatpush.msra.mxu0 0.0
    %193 = vmatpush.msra.mxu0 0.0
    %194 = vmatpush.msra.mxu0 0.0
    %195 = vmatpush.msra.mxu0 0.0
    %196 = vmatpush.msra.mxu0 0.0
    %197 = vmatpush.msra.mxu0 0.0
    %198 = vmatpush.msra.mxu0 0.0
    %199 = vmatpush.msra.mxu0 0.0
    %200 = vmatpush.msra.mxu0 0.0
    %201 = vmatpush.msra.mxu0 0.0
    %202 = vmatpush.msra.mxu0 0.0
    %203 = vmatpush.msra.mxu0 0.0
    %204 = vmatpush.msra.mxu0 0.0
    %205 = vmatpush.msra.mxu0 0.0
    %206 = vmatpush.msra.mxu0 %v105
    %207 = vmatmul.f32.gmra.mxu0 %v77
    %v208 = vpop.f32.mrf.mxu0
    %v209 = vadd.f32 %v60, %v208
    %210 = vmatmul.f32.gmra.mxu0 %v80
    %v211 = vpop.f32.mrf.mxu0
    %v212 = vadd.f32 %v60, %v211
    %213 = vmatmul.f32.gmra.mxu0 %v83
    %v214 = vpop.f32.mrf.mxu0
    %v215 = vadd.f32 %v60, %v214
    %216 = vmatmul.f32.gmra.mxu0 %v86
    %v217 = vpop.f32.mrf.mxu0
    %v218 = vadd.f32 %v60, %v217
    %219 = vmatmul.f32.gmra.mxu0 %v89
    %v220 = vpop.f32.mrf.mxu0
    %v221 = vadd.f32 %v60, %v220
    %222 = vmatmul.f32.gmra.mxu0 %v92
    %v223 = vpop.f32.mrf.mxu0
    %v224 = vadd.f32 %v60, %v223
    %225 = vmatmul.f32.gmra.mxu0 %v95
    %v226 = vpop.f32.mrf.mxu0
    %v227 = vadd.f32 %v60, %v226
    %228 = vmatmul.f32.gmra.mxu0 %v98
    %v229 = vpop.f32.mrf.mxu0
    %v230 = vadd.f32 %v60, %v229
    %231 = vdwg.mxu0
    %232 = vmatpush.msra.mxu0 0.0
    %233 = vmatpush.msra.mxu0 0.0
    %234 = vmatpush.msra.mxu0 0.0
    %235 = vmatpush.msra.mxu0 0.0
    %236 = vmatpush.msra.mxu0 0.0
    %237 = vmatpush.msra.mxu0 0.0
    %238 = vmatpush.msra.mxu0 0.0
    %239 = vmatpush.msra.mxu0 0.0
    %240 = vmatpush.msra.mxu0 0.0
    %241 = vmatpush.msra.mxu0 0.0
    %242 = vmatpush.msra.mxu0 0.0
    %243 = vmatpush.msra.mxu0 0.0
    %244 = vmatpush.msra.mxu0 0.0
    %245 = vmatpush.msra.mxu0 0.0
    %246 = vmatpush.msra.mxu0 0.0
    %247 = vmatpush.msra.mxu0 %v107
    %248 = vmatmul.f32.gmra.mxu0 %v77
    %v249 = vpop.f32.mrf.mxu0
    %v250 = vadd.f32 %v61, %v249
    %251 = vmatmul.f32.gmra.mxu0 %v80
    %v252 = vpop.f32.mrf.mxu0
    %v253 = vadd.f32 %v61, %v252
    %254 = vmatmul.f32.gmra.mxu0 %v83
    %v255 = vpop.f32.mrf.mxu0
    %v256 = vadd.f32 %v61, %v255
    %257 = vmatmul.f32.gmra.mxu0 %v86
    %v258 = vpop.f32.mrf.mxu0
    %v259 = vadd.f32 %v61, %v258
    %260 = vmatmul.f32.gmra.mxu0 %v89
    %v261 = vpop.f32.mrf.mxu0
    %v262 = vadd.f32 %v61, %v261
    %263 = vmatmul.f32.gmra.mxu0 %v92
    %v264 = vpop.f32.mrf.mxu0
    %v265 = vadd.f32 %v61, %v264
    %266 = vmatmul.f32.gmra.mxu0 %v95
    %v267 = vpop.f32.mrf.mxu0
    %v268 = vadd.f32 %v61, %v267
    %269 = vmatmul.f32.gmra.mxu0 %v98
    %v270 = vpop.f32.mrf.mxu0
    %v271 = vadd.f32 %v61, %v270
    %272 = vdwg.mxu0
    %273 = vst [vmem:[#allocation2] sm:$0xff] %v127
    %274 = vst [vmem:[#allocation2 + $0x8] sm:$0xff] %v168
    %275 = vst [vmem:[#allocation2 + $0x10] sm:$0xff] %v209
    %276 = vst [vmem:[#allocation2 + $0x18] sm:$0xff] %v250
    %277 = vst [vmem:[#allocation2 + $0x20] sm:$0xff] %v130
    %278 = vst [vmem:[#allocation2 + $0x28] sm:$0xff] %v171
    %279 = vst [vmem:[#allocation2 + $0x30] sm:$0xff] %v212
    %280 = vst [vmem:[#allocation2 + $0x38] sm:$0xff] %v253
    %281 = vst [vmem:[#allocation2 + $0x40] sm:$0xff] %v133
    %282 = vst [vmem:[#allocation2 + $0x48] sm:$0xff] %v174
    %283 = vst [vmem:[#allocation2 + $0x50] sm:$0xff] %v215
    %284 = vst [vmem:[#allocation2 + $0x58] sm:$0xff] %v256
    %285 = vst [vmem:[#allocation2 + $0x60] sm:$0xff] %v136
    %286 = vst [vmem:[#allocation2 + $0x68] sm:$0xff] %v177
    %287 = vst [vmem:[#allocation2 + $0x70] sm:$0xff] %v218
    %288 = vst [vmem:[#allocation2 + $0x78] sm:$0xff] %v259
    %289 = vst [vmem:[#allocation2 + $0x80] sm:$0xff] %v139
    %290 = vst [vmem:[#allocation2 + $0x88] sm:$0xff] %v180
    %291 = vst [vmem:[#allocation2 + $0x90] sm:$0xff] %v221
    %292 = vst [vmem:[#allocation2 + $0x98] sm:$0xff] %v262
    %293 = vst [vmem:[#allocation2 + $0xa0] sm:$0xff] %v142
    %294 = vst [vmem:[#allocation2 + $0xa8] sm:$0xff] %v183
    %295 = vst [vmem:[#allocation2 + $0xb0] sm:$0xff] %v224
    %296 = vst [vmem:[#allocation2 + $0xb8] sm:$0xff] %v265
    %297 = vst [vmem:[#allocation2 + $0xc0] sm:$0xff] %v145
    %298 = vst [vmem:[#allocation2 + $0xc8] sm:$0xff] %v186
    %299 = vst [vmem:[#allocation2 + $0xd0] sm:$0xff] %v227
    %300 = vst [vmem:[#allocation2 + $0xd8] sm:$0xff] %v268
    %301 = vst [vmem:[#allocation2 + $0xe0] sm:$0xff] %v148
    %302 = vst [vmem:[#allocation2 + $0xe8] sm:$0xff] %v189
    %303 = vst [vmem:[#allocation2 + $0xf0] sm:$0xff] %v230
    %304 = vst [vmem:[#allocation2 + $0xf8] sm:$0xff] %v271
    %v305 = vld [vmem:[#allocation5] sm:$0xff]
    %v306 = vld [vmem:[#allocation5 + $0x8] sm:$0xff]
    %v307 = vld [vmem:[#allocation5 + $0x10] sm:$0xff]
    %v308 = vld [vmem:[#allocation5 + $0x18] sm:$0xff]
    %v309 = vld [vmem:[#allocation5 + $0x20] sm:$0xff]
    %v310 = vld [vmem:[#allocation5 + $0x28] sm:$0xff]
    %v311 = vld [vmem:[#allocation5 + $0x30] sm:$0xff]
    %v312 = vld [vmem:[#allocation5 + $0x38] sm:$0xff]
    %v313 = vld [vmem:[#allocation5 + $0x40] sm:$0xff]
    %v314 = vld [vmem:[#allocation5 + $0x48] sm:$0xff]
    %v315 = vld [vmem:[#allocation5 + $0x50] sm:$0xff]
    %v316 = vld [vmem:[#allocation5 + $0x58] sm:$0xff]
    %v317 = vld [vmem:[#allocation5 + $0x60] sm:$0xff]
    %v318 = vld [vmem:[#allocation5 + $0x68] sm:$0xff]
    %v319 = vld [vmem:[#allocation5 + $0x70] sm:$0xff]
    %v320 = vld [vmem:[#allocation5 + $0x78] sm:$0xff]
    %v321 = vld [vmem:[#allocation5 + $0x80] sm:$0xff]
    %v322 = vld [vmem:[#allocation5 + $0x88] sm:$0xff]
    %v323 = vld [vmem:[#allocation5 + $0x90] sm:$0xff]
    %v324 = vld [vmem:[#allocation5 + $0x98] sm:$0xff]
    %v325 = vld [vmem:[#allocation5 + $0xa0] sm:$0xff]
    %v326 = vld [vmem:[#allocation5 + $0xa8] sm:$0xff]
    %v327 = vld [vmem:[#allocation5 + $0xb0] sm:$0xff]
    %v328 = vld [vmem:[#allocation5 + $0xb8] sm:$0xff]
    %v329 = vld [vmem:[#allocation5 + $0xc0] sm:$0xff]
    %v330 = vld [vmem:[#allocation5 + $0xc8] sm:$0xff]
    %v331 = vld [vmem:[#allocation5 + $0xd0] sm:$0xff]
    %v332 = vld [vmem:[#allocation5 + $0xd8] sm:$0xff]
    %v333 = vld [vmem:[#allocation5 + $0xe0] sm:$0xff]
    %v334 = vld [vmem:[#allocation5 + $0xe8] sm:$0xff]
    %v335 = vld [vmem:[#allocation5 + $0xf0] sm:$0xff]
    %v336 = vld [vmem:[#allocation5 + $0xf8] sm:$0xff]
    %v337 = vld [vmem:[#allocation5 + $0x100] sm:$0xff]
    %v338 = vld [vmem:[#allocation5 + $0x108] sm:$0xff]
    %v339 = vld [vmem:[#allocation5 + $0x110] sm:$0xff]
    %v340 = vld [vmem:[#allocation5 + $0x118] sm:$0xff]
    %v341 = vld [vmem:[#allocation5 + $0x120] sm:$0xff]
    %v342 = vld [vmem:[#allocation5 + $0x128] sm:$0xff]
    %v343 = vld [vmem:[#allocation5 + $0x130] sm:$0xff]
    %v344 = vld [vmem:[#allocation5 + $0x138] sm:$0xff]
    %v345 = vld [vmem:[#allocation5 + $0x140] sm:$0xff]
    %v346 = vld [vmem:[#allocation5 + $0x148] sm:$0xff]
    %v347 = vld [vmem:[#allocation5 + $0x150] sm:$0xff]
    %v348 = vld [vmem:[#allocation5 + $0x158] sm:$0xff]
    %v349 = vld [vmem:[#allocation5 + $0x160] sm:$0xff]
    %v350 = vld [vmem:[#allocation5 + $0x168] sm:$0xff]
    %v351 = vld [vmem:[#allocation5 + $0x170] sm:$0xff]
    %v352 = vld [vmem:[#allocation5 + $0x178] sm:$0xff]
    %v353 = vld [vmem:[#allocation5 + $0x180] sm:$0xff]
    %v354 = vld [vmem:[#allocation5 + $0x188] sm:$0xff]
    %v355 = vld [vmem:[#allocation5 + $0x190] sm:$0xff]
    %v356 = vld [vmem:[#allocation5 + $0x198] sm:$0xff]
    %v357 = vld [vmem:[#allocation5 + $0x1a0] sm:$0xff]
    %v358 = vld [vmem:[#allocation5 + $0x1a8] sm:$0xff]
    %v359 = vld [vmem:[#allocation5 + $0x1b0] sm:$0xff]
    %v360 = vld [vmem:[#allocation5 + $0x1b8] sm:$0xff]
    %v361 = vld [vmem:[#allocation5 + $0x1c0] sm:$0xff]
    %v362 = vld [vmem:[#allocation5 + $0x1c8] sm:$0xff]
    %v363 = vld [vmem:[#allocation5 + $0x1d0] sm:$0xff]
    %v364 = vld [vmem:[#allocation5 + $0x1d8] sm:$0xff]
    %v365 = vld [vmem:[#allocation5 + $0x1e0] sm:$0xff]
    %v366 = vld [vmem:[#allocation5 + $0x1e8] sm:$0xff]
    %v367 = vld [vmem:[#allocation5 + $0x1f0] sm:$0xff]
    %v368 = vld [vmem:[#allocation5 + $0x1f8] sm:$0xff]
    %v369 = vld [vmem:[#allocation2] sm:$0xff]
    %v370 = vld [vmem:[#allocation2 + $0x8] sm:$0xff]
    %v371 = vld [vmem:[#allocation2 + $0x10] sm:$0xff]
    %v372 = vld [vmem:[#allocation2 + $0x18] sm:$0xff]
    %v373 = vld [vmem:[#allocation3] sm:$0xff]
    %374 = vmatpush.msra.mxu0 %v365
    %375 = vmatpush.msra.mxu0 %v361
    %376 = vmatpush.msra.mxu0 %v357
    %377 = vmatpush.msra.mxu0 %v353
    %378 = vmatpush.msra.mxu0 %v349
    %379 = vmatpush.msra.mxu0 %v345
    %380 = vmatpush.msra.mxu0 %v341
    %381 = vmatpush.msra.mxu0 %v337
    %382 = vmatpush.msra.mxu0 %v333
    %383 = vmatpush.msra.mxu0 %v329
    %384 = vmatpush.msra.mxu0 %v325
    %385 = vmatpush.msra.mxu0 %v321
    %386 = vmatpush.msra.mxu0 %v317
    %387 = vmatpush.msra.mxu0 %v313
    %388 = vmatpush.msra.mxu0 %v309
    %389 = vmatpush.msra.mxu0 %v305
    %390 = vmatmul.f32.gmra.mxu0 %v373
    %v391 = vpop.f32.mrf.mxu0
    %v392 = vadd.f32 0.0, %v391
    %393 = vdwg.mxu0
    %394 = vmatpush.msra.mxu0 %v366
    %395 = vmatpush.msra.mxu0 %v362
    %396 = vmatpush.msra.mxu0 %v358
    %397 = vmatpush.msra.mxu0 %v354
    %398 = vmatpush.msra.mxu0 %v350
    %399 = vmatpush.msra.mxu0 %v346
    %400 = vmatpush.msra.mxu0 %v342
    %401 = vmatpush.msra.mxu0 %v338
    %402 = vmatpush.msra.mxu0 %v334
    %403 = vmatpush.msra.mxu0 %v330
    %404 = vmatpush.msra.mxu0 %v326
    %405 = vmatpush.msra.mxu0 %v322
    %406 = vmatpush.msra.mxu0 %v318
    %407 = vmatpush.msra.mxu0 %v314
    %408 = vmatpush.msra.mxu0 %v310
    %409 = vmatpush.msra.mxu0 %v306
    %410 = vmatmul.f32.gmra.mxu0 %v373
    %v411 = vpop.f32.mrf.mxu0
    %v412 = vadd.f32 0.0, %v411
    %413 = vdwg.mxu0
    %414 = vmatpush.msra.mxu0 %v367
    %415 = vmatpush.msra.mxu0 %v363
    %416 = vmatpush.msra.mxu0 %v359
    %417 = vmatpush.msra.mxu0 %v355
    %418 = vmatpush.msra.mxu0 %v351
    %419 = vmatpush.msra.mxu0 %v347
    %420 = vmatpush.msra.mxu0 %v343
    %421 = vmatpush.msra.mxu0 %v339
    %422 = vmatpush.msra.mxu0 %v335
    %423 = vmatpush.msra.mxu0 %v331
    %424 = vmatpush.msra.mxu0 %v327
    %425 = vmatpush.msra.mxu0 %v323
    %426 = vmatpush.msra.mxu0 %v319
    %427 = vmatpush.msra.mxu0 %v315
    %428 = vmatpush.msra.mxu0 %v311
    %429 = vmatpush.msra.mxu0 %v307
    %430 = vmatmul.f32.gmra.mxu0 %v373
    %v431 = vpop.f32.mrf.mxu0
    %v432 = vadd.f32 0.0, %v431
    %433 = vdwg.mxu0
    %434 = vmatpush.msra.mxu0 %v368
    %435 = vmatpush.msra.mxu0 %v364
    %436 = vmatpush.msra.mxu0 %v360
    %437 = vmatpush.msra.mxu0 %v356
    %438 = vmatpush.msra.mxu0 %v352
    %439 = vmatpush.msra.mxu0 %v348
    %440 = vmatpush.msra.mxu0 %v344
    %441 = vmatpush.msra.mxu0 %v340
    %442 = vmatpush.msra.mxu0 %v336
    %443 = vmatpush.msra.mxu0 %v332
    %444 = vmatpush.msra.mxu0 %v328
    %445 = vmatpush.msra.mxu0 %v324
    %446 = vmatpush.msra.mxu0 %v320
    %447 = vmatpush.msra.mxu0 %v316
    %448 = vmatpush.msra.mxu0 %v312
    %449 = vmatpush.msra.mxu0 %v308
    %450 = vmatmul.f32.gmra.mxu0 %v373
    %v451 = vpop.f32.mrf.mxu0
    %v452 = vadd.f32 0.0, %v451
    %453 = vdwg.mxu0
    %v454 = vadd.f32 %v369, %v392
    %v455 = vadd.f32 %v370, %v412
    %v456 = vadd.f32 %v371, %v432
    %v457 = vadd.f32 %v372, %v452
    %v458 = vxor.u32 %v454, 2147483648
    %v459 = vmul.f32 %v458, 1.442695
    %v460 = vpow.pop %v459
    %v461 = vadd.f32 %v460, 1.0
    %v462 = vrcp.pop %v461
    %v463 = vmul.f32 %v461, %v462
    %v464 = vsub.f32 1.0, %v463
    %v465 = vmul.f32 %v462, %v464
    %v466 = vadd.f32 %v462, %v465
    %vm467 = vweird.f32 %v461
    %vm468 = vweird.f32 %v462
    %vm469 = vmor %vm467, %vm468
    %v470 = vsel %vm469, %v462, %v466
    %v471 = vand.u32 2147483647, %v461
    %vm472 = vcmp.eq.f32.partialorder %v471, 8.507059e+37
    %v473 = vand.u32 %v461, 2147483648
    %v474 = vor.u32 1.1754944e-38, %v473
    %v475 = vsel %vm472, %v474, %v470
    %v476 = vmul.f32 1.0, %v475
    %v477 = vxor.u32 %v455, 2147483648
    %v478 = vmul.f32 %v477, 1.442695
    %v479 = vpow.pop %v478
    %v480 = vadd.f32 %v479, 1.0
    %v481 = vrcp.pop %v480
    %v482 = vmul.f32 %v480, %v481
    %v483 = vsub.f32 1.0, %v482
    %v484 = vmul.f32 %v481, %v483
    %v485 = vadd.f32 %v481, %v484
    %vm486 = vweird.f32 %v480
    %vm487 = vweird.f32 %v481
    %vm488 = vmor %vm486, %vm487
    %v489 = vsel %vm488, %v481, %v485
    %v490 = vand.u32 2147483647, %v480
    %vm491 = vcmp.eq.f32.partialorder %v490, 8.507059e+37
    %v492 = vand.u32 %v480, 2147483648
    %v493 = vor.u32 1.1754944e-38, %v492
    %v494 = vsel %vm491, %v493, %v489
    %v495 = vmul.f32 1.0, %v494
    %v496 = vtanh.pop %v456
    %v497 = vxor.u32 %v457, 2147483648
    %v498 = vmul.f32 %v497, 1.442695
    %v499 = vpow.pop %v498
    %v500 = vadd.f32 %v499, 1.0
    %v501 = vrcp.pop %v500
    %v502 = vmul.f32 %v500, %v501
    %v503 = vsub.f32 1.0, %v502
    %v504 = vmul.f32 %v501, %v503
    %v505 = vadd.f32 %v501, %v504
    %vm506 = vweird.f32 %v500
    %vm507 = vweird.f32 %v501
    %vm508 = vmor %vm506, %vm507
    %v509 = vsel %vm508, %v501, %v505
    %v510 = vand.u32 2147483647, %v500
    %vm511 = vcmp.eq.f32.partialorder %v510, 8.507059e+37
    %v512 = vand.u32 %v500, 2147483648
    %v513 = vor.u32 1.1754944e-38, %v512
    %v514 = vsel %vm511, %v513, %v509
    %v515 = vmul.f32 1.0, %v514
    %v516 = vld [vmem:[#allocation4] sm:$0xff]
    %v517 = vmul.f32 %v495, %v516
    %v518 = vmul.f32 %v476, %v496
    %v519 = vadd.f32 %v517, %v518
    %v520 = vtanh.pop %v519
    %v521 = vmul.f32 %v515, %v520
    %522 = vst [vmem:[#allocation4] sm:$0xff] %v519
    %523 = vst [vmem:[#allocation3] sm:$0xff] %v521
    %524 = vst [vmem:[#allocation8] sm:$0xff] %v521
    %v525 = vld [vmem:[#allocation2 + $0x20] sm:$0xff]
    %v526 = vld [vmem:[#allocation2 + $0x28] sm:$0xff]
    %v527 = vld [vmem:[#allocation2 + $0x30] sm:$0xff]
    %v528 = vld [vmem:[#allocation2 + $0x38] sm:$0xff]
    %v529 = vld [vmem:[#allocation3] sm:$0xff]
    %530 = vmatpush.msra.mxu0 %v365
    %531 = vmatpush.msra.mxu0 %v361
    %532 = vmatpush.msra.mxu0 %v357
    %533 = vmatpush.msra.mxu0 %v353
    %534 = vmatpush.msra.mxu0 %v349
    %535 = vmatpush.msra.mxu0 %v345
    %536 = vmatpush.msra.mxu0 %v341
    %537 = vmatpush.msra.mxu0 %v337
    %538 = vmatpush.msra.mxu0 %v333
    %539 = vmatpush.msra.mxu0 %v329
    %540 = vmatpush.msra.mxu0 %v325
    %541 = vmatpush.msra.mxu0 %v321
    %542 = vmatpush.msra.mxu0 %v317
    %543 = vmatpush.msra.mxu0 %v313
    %544 = vmatpush.msra.mxu0 %v309
    %545 = vmatpush.msra.mxu0 %v305
    %546 = vmatmul.f32.gmra.mxu0 %v529
    %v547 = vpop.f32.mrf.mxu0
    %v548 = vadd.f32 0.0, %v547
    %549 = vdwg.mxu0
    %550 = vmatpush.msra.mxu0 %v366
    %551 = vmatpush.msra.mxu0 %v362
    %552 = vmatpush.msra.mxu0 %v358
    %553 = vmatpush.msra.mxu0 %v354
    %554 = vmatpush.msra.mxu0 %v350
    %555 = vmatpush.msra.mxu0 %v346
    %556 = vmatpush.msra.mxu0 %v342
    %557 = vmatpush.msra.mxu0 %v338
    %558 = vmatpush.msra.mxu0 %v334
    %559 = vmatpush.msra.mxu0 %v330
    %560 = vmatpush.msra.mxu0 %v326
    %561 = vmatpush.msra.mxu0 %v322
    %562 = vmatpush.msra.mxu0 %v318
    %563 = vmatpush.msra.mxu0 %v314
    %564 = vmatpush.msra.mxu0 %v310
    %565 = vmatpush.msra.mxu0 %v306
    %566 = vmatmul.f32.gmra.mxu0 %v529
    %v567 = vpop.f32.mrf.mxu0
    %v568 = vadd.f32 0.0, %v567
    %569 = vdwg.mxu0
    %570 = vmatpush.msra.mxu0 %v367
    %571 = vmatpush.msra.mxu0 %v363
    %572 = vmatpush.msra.mxu0 %v359
    %573 = vmatpush.msra.mxu0 %v355
    %574 = vmatpush.msra.mxu0 %v351
    %575 = vmatpush.msra.mxu0 %v347
    %576 = vmatpush.msra.mxu0 %v343
    %577 = vmatpush.msra.mxu0 %v339
    %578 = vmatpush.msra.mxu0 %v335
    %579 = vmatpush.msra.mxu0 %v331
    %580 = vmatpush.msra.mxu0 %v327
    %581 = vmatpush.msra.mxu0 %v323
    %582 = vmatpush.msra.mxu0 %v319
    %583 = vmatpush.msra.mxu0 %v315
    %584 = vmatpush.msra.mxu0 %v311
    %585 = vmatpush.msra.mxu0 %v307
    %586 = vmatmul.f32.gmra.mxu0 %v529
    %v587 = vpop.f32.mrf.mxu0
    %v588 = vadd.f32 0.0, %v587
    %589 = vdwg.mxu0
    %590 = vmatpush.msra.mxu0 %v368
    %591 = vmatpush.msra.mxu0 %v364
    %592 = vmatpush.msra.mxu0 %v360
    %593 = vmatpush.msra.mxu0 %v356
    %594 = vmatpush.msra.mxu0 %v352
    %595 = vmatpush.msra.mxu0 %v348
    %596 = vmatpush.msra.mxu0 %v344
    %597 = vmatpush.msra.mxu0 %v340
    %598 = vmatpush.msra.mxu0 %v336
    %599 = vmatpush.msra.mxu0 %v332
    %600 = vmatpush.msra.mxu0 %v328
    %601 = vmatpush.msra.mxu0 %v324
    %602 = vmatpush.msra.mxu0 %v320
    %603 = vmatpush.msra.mxu0 %v316
    %604 = vmatpush.msra.mxu0 %v312
    %605 = vmatpush.msra.mxu0 %v308
    %606 = vmatmul.f32.gmra.mxu0 %v529
    %v607 = vpop.f32.mrf.mxu0
    %v608 = vadd.f32 0.0, %v607
    %609 = vdwg.mxu0
    %v610 = vadd.f32 %v525, %v548
    %v611 = vadd.f32 %v526, %v568
    %v612 = vadd.f32 %v527, %v588
    %v613 = vadd.f32 %v528, %v608
    %v614 = vxor.u32 %v610, 2147483648
    %v615 = vmul.f32 %v614, 1.442695
    %v616 = vpow.pop %v615
    %v617 = vadd.f32 %v616, 1.0
    %v618 = vrcp.pop %v617
    %v619 = vmul.f32 %v617, %v618
    %v620 = vsub.f32 1.0, %v619
    %v621 = vmul.f32 %v618, %v620
    %v622 = vadd.f32 %v618, %v621
    %vm623 = vweird.f32 %v617
    %vm624 = vweird.f32 %v618
    %vm625 = vmor %vm623, %vm624
    %v626 = vsel %vm625, %v618, %v622
    %v627 = vand.u32 2147483647, %v617
    %vm628 = vcmp.eq.f32.partialorder %v627, 8.507059e+37
    %v629 = vand.u32 %v617, 2147483648
    %v630 = vor.u32 1.1754944e-38, %v629
    %v631 = vsel %vm628, %v630, %v626
    %v632 = vmul.f32 1.0, %v631
    %v633 = vxor.u32 %v611, 2147483648
    %v634 = vmul.f32 %v633, 1.442695
    %v635 = vpow.pop %v634
    %v636 = vadd.f32 %v635, 1.0
    %v637 = vrcp.pop %v636
    %v638 = vmul.f32 %v636, %v637
    %v639 = vsub.f32 1.0, %v638
    %v640 = vmul.f32 %v637, %v639
    %v641 = vadd.f32 %v637, %v640
    %vm642 = vweird.f32 %v636
    %vm643 = vweird.f32 %v637
    %vm644 = vmor %vm642, %vm643
    %v645 = vsel %vm644, %v637, %v641
    %v646 = vand.u32 2147483647, %v636
    %vm647 = vcmp.eq.f32.partialorder %v646, 8.507059e+37
    %v648 = vand.u32 %v636, 2147483648
    %v649 = vor.u32 1.1754944e-38, %v648
    %v650 = vsel %vm647, %v649, %v645
    %v651 = vmul.f32 1.0, %v650
    %v652 = vtanh.pop %v612
    %v653 = vxor.u32 %v613, 2147483648
    %v654 = vmul.f32 %v653, 1.442695
    %v655 = vpow.pop %v654
    %v656 = vadd.f32 %v655, 1.0
    %v657 = vrcp.pop %v656
    %v658 = vmul.f32 %v656, %v657
    %v659 = vsub.f32 1.0, %v658
    %v660 = vmul.f32 %v657, %v659
    %v661 = vadd.f32 %v657, %v660
    %vm662 = vweird.f32 %v656
    %vm663 = vweird.f32 %v657
    %vm664 = vmor %vm662, %vm663
    %v665 = vsel %vm664, %v657, %v661
    %v666 = vand.u32 2147483647, %v656
    %vm667 = vcmp.eq.f32.partialorder %v666, 8.507059e+37
    %v668 = vand.u32 %v656, 2147483648
    %v669 = vor.u32 1.1754944e-38, %v668
    %v670 = vsel %vm667, %v669, %v665
    %v671 = vmul.f32 1.0, %v670
    %v672 = vld [vmem:[#allocation4] sm:$0xff]
    %v673 = vmul.f32 %v651, %v672
    %v674 = vmul.f32 %v632, %v652
    %v675 = vadd.f32 %v673, %v674
    %v676 = vtanh.pop %v675
    %v677 = vmul.f32 %v671, %v676
    %678 = vst [vmem:[#allocation4] sm:$0xff] %v675
    %679 = vst [vmem:[#allocation3] sm:$0xff] %v677
    %680 = vst [vmem:[#allocation8 + $0x8] sm:$0xff] %v677
    %v681 = vld [vmem:[#allocation2 + $0x40] sm:$0xff]
    %v682 = vld [vmem:[#allocation2 + $0x48] sm:$0xff]
    %v683 = vld [vmem:[#allocation2 + $0x50] sm:$0xff]
    %v684 = vld [vmem:[#allocation2 + $0x58] sm:$0xff]
    %v685 = vld [vmem:[#allocation3] sm:$0xff]
    %686 = vmatpush.msra.mxu0 %v365
    %687 = vmatpush.msra.mxu0 %v361
    %688 = vmatpush.msra.mxu0 %v357
    %689 = vmatpush.msra.mxu0 %v353
    %690 = vmatpush.msra.mxu0 %v349
    %691 = vmatpush.msra.mxu0 %v345
    %692 = vmatpush.msra.mxu0 %v341
    %693 = vmatpush.msra.mxu0 %v337
    %694 = vmatpush.msra.mxu0 %v333
    %695 = vmatpush.msra.mxu0 %v329
    %696 = vmatpush.msra.mxu0 %v325
    %697 = vmatpush.msra.mxu0 %v321
    %698 = vmatpush.msra.mxu0 %v317
    %699 = vmatpush.msra.mxu0 %v313
    %700 = vmatpush.msra.mxu0 %v309
    %701 = vmatpush.msra.mxu0 %v305
    %702 = vmatmul.f32.gmra.mxu0 %v685
    %v703 = vpop.f32.mrf.mxu0
    %v704 = vadd.f32 0.0, %v703
    %705 = vdwg.mxu0
    %706 = vmatpush.msra.mxu0 %v366
    %707 = vmatpush.msra.mxu0 %v362
    %708 = vmatpush.msra.mxu0 %v358
    %709 = vmatpush.msra.mxu0 %v354
    %710 = vmatpush.msra.mxu0 %v350
    %711 = vmatpush.msra.mxu0 %v346
    %712 = vmatpush.msra.mxu0 %v342
    %713 = vmatpush.msra.mxu0 %v338
    %714 = vmatpush.msra.mxu0 %v334
    %715 = vmatpush.msra.mxu0 %v330
    %716 = vmatpush.msra.mxu0 %v326
    %717 = vmatpush.msra.mxu0 %v322
    %718 = vmatpush.msra.mxu0 %v318
    %719 = vmatpush.msra.mxu0 %v314
    %720 = vmatpush.msra.mxu0 %v310
    %721 = vmatpush.msra.mxu0 %v306
    %722 = vmatmul.f32.gmra.mxu0 %v685
    %v723 = vpop.f32.mrf.mxu0
    %v724 = vadd.f32 0.0, %v723
    %725 = vdwg.mxu0
    %726 = vmatpush.msra.mxu0 %v367
    %727 = vmatpush.msra.mxu0 %v363
    %728 = vmatpush.msra.mxu0 %v359
    %729 = vmatpush.msra.mxu0 %v355
    %730 = vmatpush.msra.mxu0 %v351
    %731 = vmatpush.msra.mxu0 %v347
    %732 = vmatpush.msra.mxu0 %v343
    %733 = vmatpush.msra.mxu0 %v339
    %734 = vmatpush.msra.mxu0 %v335
    %735 = vmatpush.msra.mxu0 %v331
    %736 = vmatpush.msra.mxu0 %v327
    %737 = vmatpush.msra.mxu0 %v323
    %738 = vmatpush.msra.mxu0 %v319
    %739 = vmatpush.msra.mxu0 %v315
    %740 = vmatpush.msra.mxu0 %v311
    %741 = vmatpush.msra.mxu0 %v307
    %742 = vmatmul.f32.gmra.mxu0 %v685
    %v743 = vpop.f32.mrf.mxu0
    %v744 = vadd.f32 0.0, %v743
    %745 = vdwg.mxu0
    %746 = vmatpush.msra.mxu0 %v368
    %747 = vmatpush.msra.mxu0 %v364
    %748 = vmatpush.msra.mxu0 %v360
    %749 = vmatpush.msra.mxu0 %v356
    %750 = vmatpush.msra.mxu0 %v352
    %751 = vmatpush.msra.mxu0 %v348
    %752 = vmatpush.msra.mxu0 %v344
    %753 = vmatpush.msra.mxu0 %v340
    %754 = vmatpush.msra.mxu0 %v336
    %755 = vmatpush.msra.mxu0 %v332
    %756 = vmatpush.msra.mxu0 %v328
    %757 = vmatpush.msra.mxu0 %v324
    %758 = vmatpush.msra.mxu0 %v320
    %759 = vmatpush.msra.mxu0 %v316
    %760 = vmatpush.msra.mxu0 %v312
    %761 = vmatpush.msra.mxu0 %v308
    %762 = vmatmul.f32.gmra.mxu0 %v685
    %v763 = vpop.f32.mrf.mxu0
    %v764 = vadd.f32 0.0, %v763
    %765 = vdwg.mxu0
    %v766 = vadd.f32 %v681, %v704
    %v767 = vadd.f32 %v682, %v724
    %v768 = vadd.f32 %v683, %v744
    %v769 = vadd.f32 %v684, %v764
    %v770 = vxor.u32 %v766, 2147483648
    %v771 = vmul.f32 %v770, 1.442695
    %v772 = vpow.pop %v771
    %v773 = vadd.f32 %v772, 1.0
    %v774 = vrcp.pop %v773
    %v775 = vmul.f32 %v773, %v774
    %v776 = vsub.f32 1.0, %v775
    %v777 = vmul.f32 %v774, %v776
    %v778 = vadd.f32 %v774, %v777
    %vm779 = vweird.f32 %v773
    %vm780 = vweird.f32 %v774
    %vm781 = vmor %vm779, %vm780
    %v782 = vsel %vm781, %v774, %v778
    %v783 = vand.u32 2147483647, %v773
    %vm784 = vcmp.eq.f32.partialorder %v783, 8.507059e+37
    %v785 = vand.u32 %v773, 2147483648
    %v786 = vor.u32 1.1754944e-38, %v785
    %v787 = vsel %vm784, %v786, %v782
    %v788 = vmul.f32 1.0, %v787
    %v789 = vxor.u32 %v767, 2147483648
    %v790 = vmul.f32 %v789, 1.442695
    %v791 = vpow.pop %v790
    %v792 = vadd.f32 %v791, 1.0
    %v793 = vrcp.pop %v792
    %v794 = vmul.f32 %v792, %v793
    %v795 = vsub.f32 1.0, %v794
    %v796 = vmul.f32 %v793, %v795
    %v797 = vadd.f32 %v793, %v796
    %vm798 = vweird.f32 %v792
    %vm799 = vweird.f32 %v793
    %vm800 = vmor %vm798, %vm799
    %v801 = vsel %vm800, %v793, %v797
    %v802 = vand.u32 2147483647, %v792
    %vm803 = vcmp.eq.f32.partialorder %v802, 8.507059e+37
    %v804 = vand.u32 %v792, 2147483648
    %v805 = vor.u32 1.1754944e-38, %v804
    %v806 = vsel %vm803, %v805, %v801
    %v807 = vmul.f32 1.0, %v806
    %v808 = vtanh.pop %v768
    %v809 = vxor.u32 %v769, 2147483648
    %v810 = vmul.f32 %v809, 1.442695
    %v811 = vpow.pop %v810
    %v812 = vadd.f32 %v811, 1.0
    %v813 = vrcp.pop %v812
    %v814 = vmul.f32 %v812, %v813
    %v815 = vsub.f32 1.0, %v814
    %v816 = vmul.f32 %v813, %v815
    %v817 = vadd.f32 %v813, %v816
    %vm818 = vweird.f32 %v812
    %vm819 = vweird.f32 %v813
    %vm820 = vmor %vm818, %vm819
    %v821 = vsel %vm820, %v813, %v817
    %v822 = vand.u32 2147483647, %v812
    %vm823 = vcmp.eq.f32.partialorder %v822, 8.507059e+37
    %v824 = vand.u32 %v812, 2147483648
    %v825 = vor.u32 1.1754944e-38, %v824
    %v826 = vsel %vm823, %v825, %v821
    %v827 = vmul.f32 1.0, %v826
    %v828 = vld [vmem:[#allocation4] sm:$0xff]
    %v829 = vmul.f32 %v807, %v828
    %v830 = vmul.f32 %v788, %v808
    %v831 = vadd.f32 %v829, %v830
    %v832 = vtanh.pop %v831
    %v833 = vmul.f32 %v827, %v832
    %834 = vst [vmem:[#allocation4] sm:$0xff] %v831
    %835 = vst [vmem:[#allocation3] sm:$0xff] %v833
    %836 = vst [vmem:[#allocation8 + $0x10] sm:$0xff] %v833
    %v837 = vld [vmem:[#allocation2 + $0x60] sm:$0xff]
    %v838 = vld [vmem:[#allocation2 + $0x68] sm:$0xff]
    %v839 = vld [vmem:[#allocation2 + $0x70] sm:$0xff]
    %v840 = vld [vmem:[#allocation2 + $0x78] sm:$0xff]
    %v841 = vld [vmem:[#allocation3] sm:$0xff]
    %842 = vmatpush.msra.mxu0 %v365
    %843 = vmatpush.msra.mxu0 %v361
    %844 = vmatpush.msra.mxu0 %v357
    %845 = vmatpush.msra.mxu0 %v353
    %846 = vmatpush.msra.mxu0 %v349
    %847 = vmatpush.msra.mxu0 %v345
    %848 = vmatpush.msra.mxu0 %v341
    %849 = vmatpush.msra.mxu0 %v337
    %850 = vmatpush.msra.mxu0 %v333
    %851 = vmatpush.msra.mxu0 %v329
    %852 = vmatpush.msra.mxu0 %v325
    %853 = vmatpush.msra.mxu0 %v321
    %854 = vmatpush.msra.mxu0 %v317
    %855 = vmatpush.msra.mxu0 %v313
    %856 = vmatpush.msra.mxu0 %v309
    %857 = vmatpush.msra.mxu0 %v305
    %858 = vmatmul.f32.gmra.mxu0 %v841
    %v859 = vpop.f32.mrf.mxu0
    %v860 = vadd.f32 0.0, %v859
    %861 = vdwg.mxu0
    %862 = vmatpush.msra.mxu0 %v366
    %863 = vmatpush.msra.mxu0 %v362
    %864 = vmatpush.msra.mxu0 %v358
    %865 = vmatpush.msra.mxu0 %v354
    %866 = vmatpush.msra.mxu0 %v350
    %867 = vmatpush.msra.mxu0 %v346
    %868 = vmatpush.msra.mxu0 %v342
    %869 = vmatpush.msra.mxu0 %v338
    %870 = vmatpush.msra.mxu0 %v334
    %871 = vmatpush.msra.mxu0 %v330
    %872 = vmatpush.msra.mxu0 %v326
    %873 = vmatpush.msra.mxu0 %v322
    %874 = vmatpush.msra.mxu0 %v318
    %875 = vmatpush.msra.mxu0 %v314
    %876 = vmatpush.msra.mxu0 %v310
    %877 = vmatpush.msra.mxu0 %v306
    %878 = vmatmul.f32.gmra.mxu0 %v841
    %v879 = vpop.f32.mrf.mxu0
    %v880 = vadd.f32 0.0, %v879
    %881 = vdwg.mxu0
    %882 = vmatpush.msra.mxu0 %v367
    %883 = vmatpush.msra.mxu0 %v363
    %884 = vmatpush.msra.mxu0 %v359
    %885 = vmatpush.msra.mxu0 %v355
    %886 = vmatpush.msra.mxu0 %v351
    %887 = vmatpush.msra.mxu0 %v347
    %888 = vmatpush.msra.mxu0 %v343
    %889 = vmatpush.msra.mxu0 %v339
    %890 = vmatpush.msra.mxu0 %v335
    %891 = vmatpush.msra.mxu0 %v331
    %892 = vmatpush.msra.mxu0 %v327
    %893 = vmatpush.msra.mxu0 %v323
    %894 = vmatpush.msra.mxu0 %v319
    %895 = vmatpush.msra.mxu0 %v315
    %896 = vmatpush.msra.mxu0 %v311
    %897 = vmatpush.msra.mxu0 %v307
    %898 = vmatmul.f32.gmra.mxu0 %v841
    %v899 = vpop.f32.mrf.mxu0
    %v900 = vadd.f32 0.0, %v899
    %901 = vdwg.mxu0
    %902 = vmatpush.msra.mxu0 %v368
    %903 = vmatpush.msra.mxu0 %v364
    %904 = vmatpush.msra.mxu0 %v360
    %905 = vmatpush.msra.mxu0 %v356
    %906 = vmatpush.msra.mxu0 %v352
    %907 = vmatpush.msra.mxu0 %v348
    %908 = vmatpush.msra.mxu0 %v344
    %909 = vmatpush.msra.mxu0 %v340
    %910 = vmatpush.msra.mxu0 %v336
    %911 = vmatpush.msra.mxu0 %v332
    %912 = vmatpush.msra.mxu0 %v328
    %913 = vmatpush.msra.mxu0 %v324
    %914 = vmatpush.msra.mxu0 %v320
    %915 = vmatpush.msra.mxu0 %v316
    %916 = vmatpush.msra.mxu0 %v312
    %917 = vmatpush.msra.mxu0 %v308
    %918 = vmatmul.f32.gmra.mxu0 %v841
    %v919 = vpop.f32.mrf.mxu0
    %v920 = vadd.f32 0.0, %v919
    %921 = vdwg.mxu0
    %v922 = vadd.f32 %v837, %v860
    %v923 = vadd.f32 %v838, %v880
    %v924 = vadd.f32 %v839, %v900
    %v925 = vadd.f32 %v840, %v920
    %v926 = vxor.u32 %v922, 2147483648
    %v927 = vmul.f32 %v926, 1.442695
    %v928 = vpow.pop %v927
    %v929 = vadd.f32 %v928, 1.0
    %v930 = vrcp.pop %v929
    %v931 = vmul.f32 %v929, %v930
    %v932 = vsub.f32 1.0, %v931
    %v933 = vmul.f32 %v930, %v932
    %v934 = vadd.f32 %v930, %v933
    %vm935 = vweird.f32 %v929
    %vm936 = vweird.f32 %v930
    %vm937 = vmor %vm935, %vm936
    %v938 = vsel %vm937, %v930, %v934
    %v939 = vand.u32 2147483647, %v929
    %vm940 = vcmp.eq.f32.partialorder %v939, 8.507059e+37
    %v941 = vand.u32 %v929, 2147483648
    %v942 = vor.u32 1.1754944e-38, %v941
    %v943 = vsel %vm940, %v942, %v938
    %v944 = vmul.f32 1.0, %v943
    %v945 = vxor.u32 %v923, 2147483648
    %v946 = vmul.f32 %v945, 1.442695
    %v947 = vpow.pop %v946
    %v948 = vadd.f32 %v947, 1.0
    %v949 = vrcp.pop %v948
    %v950 = vmul.f32 %v948, %v949
    %v951 = vsub.f32 1.0, %v950
    %v952 = vmul.f32 %v949, %v951
    %v953 = vadd.f32 %v949, %v952
    %vm954 = vweird.f32 %v948
    %vm955 = vweird.f32 %v949
    %vm956 = vmor %vm954, %vm955
    %v957 = vsel %vm956, %v949, %v953
    %v958 = vand.u32 2147483647, %v948
    %vm959 = vcmp.eq.f32.partialorder %v958, 8.507059e+37
    %v960 = vand.u32 %v948, 2147483648
    %v961 = vor.u32 1.1754944e-38, %v960
    %v962 = vsel %vm959, %v961, %v957
    %v963 = vmul.f32 1.0, %v962
    %v964 = vtanh.pop %v924
    %v965 = vxor.u32 %v925, 2147483648
    %v966 = vmul.f32 %v965, 1.442695
    %v967 = vpow.pop %v966
    %v968 = vadd.f32 %v967, 1.0
    %v969 = vrcp.pop %v968
    %v970 = vmul.f32 %v968, %v969
    %v971 = vsub.f32 1.0, %v970
    %v972 = vmul.f32 %v969, %v971
    %v973 = vadd.f32 %v969, %v972
    %vm974 = vweird.f32 %v968
    %vm975 = vweird.f32 %v969
    %vm976 = vmor %vm974, %vm975
    %v977 = vsel %vm976, %v969, %v973
    %v978 = vand.u32 2147483647, %v968
    %vm979 = vcmp.eq.f32.partialorder %v978, 8.507059e+37
    %v980 = vand.u32 %v968, 2147483648
    %v981 = vor.u32 1.1754944e-38, %v980
    %v982 = vsel %vm979, %v981, %v977
    %v983 = vmul.f32 1.0, %v982
    %v984 = vld [vmem:[#allocation4] sm:$0xff]
    %v985 = vmul.f32 %v963, %v984
    %v986 = vmul.f32 %v944, %v964
    %v987 = vadd.f32 %v985, %v986
    %v988 = vtanh.pop %v987
    %v989 = vmul.f32 %v983, %v988
    %990 = vst [vmem:[#allocation4] sm:$0xff] %v987
    %991 = vst [vmem:[#allocation3] sm:$0xff] %v989
    %992 = vst [vmem:[#allocation8 + $0x18] sm:$0xff] %v989
    %v993 = vld [vmem:[#allocation2 + $0x80] sm:$0xff]
    %v994 = vld [vmem:[#allocation2 + $0x88] sm:$0xff]
    %v995 = vld [vmem:[#allocation2 + $0x90] sm:$0xff]
    %v996 = vld [vmem:[#allocation2 + $0x98] sm:$0xff]
    %v997 = vld [vmem:[#allocation3] sm:$0xff]
    %998 = vmatpush.msra.mxu0 %v365
    %999 = vmatpush.msra.mxu0 %v361
    %1000 = vmatpush.msra.mxu0 %v357
    %1001 = vmatpush.msra.mxu0 %v353
    %1002 = vmatpush.msra.mxu0 %v349
    %1003 = vmatpush.msra.mxu0 %v345
    %1004 = vmatpush.msra.mxu0 %v341
    %1005 = vmatpush.msra.mxu0 %v337
    %1006 = vmatpush.msra.mxu0 %v333
    %1007 = vmatpush.msra.mxu0 %v329
    %1008 = vmatpush.msra.mxu0 %v325
    %1009 = vmatpush.msra.mxu0 %v321
    %1010 = vmatpush.msra.mxu0 %v317
    %1011 = vmatpush.msra.mxu0 %v313
    %1012 = vmatpush.msra.mxu0 %v309
    %1013 = vmatpush.msra.mxu0 %v305
    %1014 = vmatmul.f32.gmra.mxu0 %v997
    %v1015 = vpop.f32.mrf.mxu0
    %v1016 = vadd.f32 0.0, %v1015
    %1017 = vdwg.mxu0
    %1018 = vmatpush.msra.mxu0 %v366
    %1019 = vmatpush.msra.mxu0 %v362
    %1020 = vmatpush.msra.mxu0 %v358
    %1021 = vmatpush.msra.mxu0 %v354
    %1022 = vmatpush.msra.mxu0 %v350
    %1023 = vmatpush.msra.mxu0 %v346
    %1024 = vmatpush.msra.mxu0 %v342
    %1025 = vmatpush.msra.mxu0 %v338
    %1026 = vmatpush.msra.mxu0 %v334
    %1027 = vmatpush.msra.mxu0 %v330
    %1028 = vmatpush.msra.mxu0 %v326
    %1029 = vmatpush.msra.mxu0 %v322
    %1030 = vmatpush.msra.mxu0 %v318
    %1031 = vmatpush.msra.mxu0 %v314
    %1032 = vmatpush.msra.mxu0 %v310
    %1033 = vmatpush.msra.mxu0 %v306
    %1034 = vmatmul.f32.gmra.mxu0 %v997
    %v1035 = vpop.f32.mrf.mxu0
    %v1036 = vadd.f32 0.0, %v1035
    %1037 = vdwg.mxu0
    %1038 = vmatpush.msra.mxu0 %v367
    %1039 = vmatpush.msra.mxu0 %v363
    %1040 = vmatpush.msra.mxu0 %v359
    %1041 = vmatpush.msra.mxu0 %v355
    %1042 = vmatpush.msra.mxu0 %v351
    %1043 = vmatpush.msra.mxu0 %v347
    %1044 = vmatpush.msra.mxu0 %v343
    %1045 = vmatpush.msra.mxu0 %v339
    %1046 = vmatpush.msra.mxu0 %v335
    %1047 = vmatpush.msra.mxu0 %v331
    %1048 = vmatpush.msra.mxu0 %v327
    %1049 = vmatpush.msra.mxu0 %v323
    %1050 = vmatpush.msra.mxu0 %v319
    %1051 = vmatpush.msra.mxu0 %v315
    %1052 = vmatpush.msra.mxu0 %v311
    %1053 = vmatpush.msra.mxu0 %v307
    %1054 = vmatmul.f32.gmra.mxu0 %v997
    %v1055 = vpop.f32.mrf.mxu0
    %v1056 = vadd.f32 0.0, %v1055
    %1057 = vdwg.mxu0
    %1058 = vmatpush.msra.mxu0 %v368
    %1059 = vmatpush.msra.mxu0 %v364
    %1060 = vmatpush.msra.mxu0 %v360
    %1061 = vmatpush.msra.mxu0 %v356
    %1062 = vmatpush.msra.mxu0 %v352
    %1063 = vmatpush.msra.mxu0 %v348
    %1064 = vmatpush.msra.mxu0 %v344
    %1065 = vmatpush.msra.mxu0 %v340
    %1066 = vmatpush.msra.mxu0 %v336
    %1067 = vmatpush.msra.mxu0 %v332
    %1068 = vmatpush.msra.mxu0 %v328
    %1069 = vmatpush.msra.mxu0 %v324
    %1070 = vmatpush.msra.mxu0 %v320
    %1071 = vmatpush.msra.mxu0 %v316
    %1072 = vmatpush.msra.mxu0 %v312
    %1073 = vmatpush.msra.mxu0 %v308
    %1074 = vmatmul.f32.gmra.mxu0 %v997
    %v1075 = vpop.f32.mrf.mxu0
    %v1076 = vadd.f32 0.0, %v1075
    %1077 = vdwg.mxu0
    %v1078 = vadd.f32 %v993, %v1016
    %v1079 = vadd.f32 %v994, %v1036
    %v1080 = vadd.f32 %v995, %v1056
    %v1081 = vadd.f32 %v996, %v1076
    %v1082 = vxor.u32 %v1078, 2147483648
    %v1083 = vmul.f32 %v1082, 1.442695
    %v1084 = vpow.pop %v1083
    %v1085 = vadd.f32 %v1084, 1.0
    %v1086 = vrcp.pop %v1085
    %v1087 = vmul.f32 %v1085, %v1086
    %v1088 = vsub.f32 1.0, %v1087
    %v1089 = vmul.f32 %v1086, %v1088
    %v1090 = vadd.f32 %v1086, %v1089
    %vm1091 = vweird.f32 %v1085
    %vm1092 = vweird.f32 %v1086
    %vm1093 = vmor %vm1091, %vm1092
    %v1094 = vsel %vm1093, %v1086, %v1090
    %v1095 = vand.u32 2147483647, %v1085
    %vm1096 = vcmp.eq.f32.partialorder %v1095, 8.507059e+37
    %v1097 = vand.u32 %v1085, 2147483648
    %v1098 = vor.u32 1.1754944e-38, %v1097
    %v1099 = vsel %vm1096, %v1098, %v1094
    %v1100 = vmul.f32 1.0, %v1099
    %v1101 = vxor.u32 %v1079, 2147483648
    %v1102 = vmul.f32 %v1101, 1.442695
    %v1103 = vpow.pop %v1102
    %v1104 = vadd.f32 %v1103, 1.0
    %v1105 = vrcp.pop %v1104
    %v1106 = vmul.f32 %v1104, %v1105
    %v1107 = vsub.f32 1.0, %v1106
    %v1108 = vmul.f32 %v1105, %v1107
    %v1109 = vadd.f32 %v1105, %v1108
    %vm1110 = vweird.f32 %v1104
    %vm1111 = vweird.f32 %v1105
    %vm1112 = vmor %vm1110, %vm1111
    %v1113 = vsel %vm1112, %v1105, %v1109
    %v1114 = vand.u32 2147483647, %v1104
    %vm1115 = vcmp.eq.f32.partialorder %v1114, 8.507059e+37
    %v1116 = vand.u32 %v1104, 2147483648
    %v1117 = vor.u32 1.1754944e-38, %v1116
    %v1118 = vsel %vm1115, %v1117, %v1113
    %v1119 = vmul.f32 1.0, %v1118
    %v1120 = vtanh.pop %v1080
    %v1121 = vxor.u32 %v1081, 2147483648
    %v1122 = vmul.f32 %v1121, 1.442695
    %v1123 = vpow.pop %v1122
    %v1124 = vadd.f32 %v1123, 1.0
    %v1125 = vrcp.pop %v1124
    %v1126 = vmul.f32 %v1124, %v1125
    %v1127 = vsub.f32 1.0, %v1126
    %v1128 = vmul.f32 %v1125, %v1127
    %v1129 = vadd.f32 %v1125, %v1128
    %vm1130 = vweird.f32 %v1124
    %vm1131 = vweird.f32 %v1125
    %vm1132 = vmor %vm1130, %vm1131
    %v1133 = vsel %vm1132, %v1125, %v1129
    %v1134 = vand.u32 2147483647, %v1124
    %vm1135 = vcmp.eq.f32.partialorder %v1134, 8.507059e+37
    %v1136 = vand.u32 %v1124, 2147483648
    %v1137 = vor.u32 1.1754944e-38, %v1136
    %v1138 = vsel %vm1135, %v1137, %v1133
    %v1139 = vmul.f32 1.0, %v1138
    %v1140 = vld [vmem:[#allocation4] sm:$0xff]
    %v1141 = vmul.f32 %v1119, %v1140
    %v1142 = vmul.f32 %v1100, %v1120
    %v1143 = vadd.f32 %v1141, %v1142
    %v1144 = vtanh.pop %v1143
    %v1145 = vmul.f32 %v1139, %v1144
    %1146 = vst [vmem:[#allocation4] sm:$0xff] %v1143
    %1147 = vst [vmem:[#allocation3] sm:$0xff] %v1145
    %1148 = vst [vmem:[#allocation8 + $0x20] sm:$0xff] %v1145
    %v1149 = vld [vmem:[#allocation2 + $0xa0] sm:$0xff]
    %v1150 = vld [vmem:[#allocation2 + $0xa8] sm:$0xff]
    %v1151 = vld [vmem:[#allocation2 + $0xb0] sm:$0xff]
    %v1152 = vld [vmem:[#allocation2 + $0xb8] sm:$0xff]
    %v1153 = vld [vmem:[#allocation3] sm:$0xff]
    %1154 = vmatpush.msra.mxu0 %v365
    %1155 = vmatpush.msra.mxu0 %v361
    %1156 = vmatpush.msra.mxu0 %v357
    %1157 = vmatpush.msra.mxu0 %v353
    %1158 = vmatpush.msra.mxu0 %v349
    %1159 = vmatpush.msra.mxu0 %v345
    %1160 = vmatpush.msra.mxu0 %v341
    %1161 = vmatpush.msra.mxu0 %v337
    %1162 = vmatpush.msra.mxu0 %v333
    %1163 = vmatpush.msra.mxu0 %v329
    %1164 = vmatpush.msra.mxu0 %v325
    %1165 = vmatpush.msra.mxu0 %v321
    %1166 = vmatpush.msra.mxu0 %v317
    %1167 = vmatpush.msra.mxu0 %v313
    %1168 = vmatpush.msra.mxu0 %v309
    %1169 = vmatpush.msra.mxu0 %v305
    %1170 = vmatmul.f32.gmra.mxu0 %v1153
    %v1171 = vpop.f32.mrf.mxu0
    %v1172 = vadd.f32 0.0, %v1171
    %1173 = vdwg.mxu0
    %1174 = vmatpush.msra.mxu0 %v366
    %1175 = vmatpush.msra.mxu0 %v362
    %1176 = vmatpush.msra.mxu0 %v358
    %1177 = vmatpush.msra.mxu0 %v354
    %1178 = vmatpush.msra.mxu0 %v350
    %1179 = vmatpush.msra.mxu0 %v346
    %1180 = vmatpush.msra.mxu0 %v342
    %1181 = vmatpush.msra.mxu0 %v338
    %1182 = vmatpush.msra.mxu0 %v334
    %1183 = vmatpush.msra.mxu0 %v330
    %1184 = vmatpush.msra.mxu0 %v326
    %1185 = vmatpush.msra.mxu0 %v322
    %1186 = vmatpush.msra.mxu0 %v318
    %1187 = vmatpush.msra.mxu0 %v314
    %1188 = vmatpush.msra.mxu0 %v310
    %1189 = vmatpush.msra.mxu0 %v306
    %1190 = vmatmul.f32.gmra.mxu0 %v1153
    %v1191 = vpop.f32.mrf.mxu0
    %v1192 = vadd.f32 0.0, %v1191
    %1193 = vdwg.mxu0
    %1194 = vmatpush.msra.mxu0 %v367
    %1195 = vmatpush.msra.mxu0 %v363
    %1196 = vmatpush.msra.mxu0 %v359
    %1197 = vmatpush.msra.mxu0 %v355
    %1198 = vmatpush.msra.mxu0 %v351
    %1199 = vmatpush.msra.mxu0 %v347
    %1200 = vmatpush.msra.mxu0 %v343
    %1201 = vmatpush.msra.mxu0 %v339
    %1202 = vmatpush.msra.mxu0 %v335
    %1203 = vmatpush.msra.mxu0 %v331
    %1204 = vmatpush.msra.mxu0 %v327
    %1205 = vmatpush.msra.mxu0 %v323
    %1206 = vmatpush.msra.mxu0 %v319
    %1207 = vmatpush.msra.mxu0 %v315
    %1208 = vmatpush.msra.mxu0 %v311
    %1209 = vmatpush.msra.mxu0 %v307
    %1210 = vmatmul.f32.gmra.mxu0 %v1153
    %v1211 = vpop.f32.mrf.mxu0
    %v1212 = vadd.f32 0.0, %v1211
    %1213 = vdwg.mxu0
    %1214 = vmatpush.msra.mxu0 %v368
    %1215 = vmatpush.msra.mxu0 %v364
    %1216 = vmatpush.msra.mxu0 %v360
    %1217 = vmatpush.msra.mxu0 %v356
    %1218 = vmatpush.msra.mxu0 %v352
    %1219 = vmatpush.msra.mxu0 %v348
    %1220 = vmatpush.msra.mxu0 %v344
    %1221 = vmatpush.msra.mxu0 %v340
    %1222 = vmatpush.msra.mxu0 %v336
    %1223 = vmatpush.msra.mxu0 %v332
    %1224 = vmatpush.msra.mxu0 %v328
    %1225 = vmatpush.msra.mxu0 %v324
    %1226 = vmatpush.msra.mxu0 %v320
    %1227 = vmatpush.msra.mxu0 %v316
    %1228 = vmatpush.msra.mxu0 %v312
    %1229 = vmatpush.msra.mxu0 %v308
    %1230 = vmatmul.f32.gmra.mxu0 %v1153
    %v1231 = vpop.f32.mrf.mxu0
    %v1232 = vadd.f32 0.0, %v1231
    %1233 = vdwg.mxu0
    %v1234 = vadd.f32 %v1149, %v1172
    %v1235 = vadd.f32 %v1150, %v1192
    %v1236 = vadd.f32 %v1151, %v1212
    %v1237 = vadd.f32 %v1152, %v1232
    %v1238 = vxor.u32 %v1234, 2147483648
    %v1239 = vmul.f32 %v1238, 1.442695
    %v1240 = vpow.pop %v1239
    %v1241 = vadd.f32 %v1240, 1.0
    %v1242 = vrcp.pop %v1241
    %v1243 = vmul.f32 %v1241, %v1242
    %v1244 = vsub.f32 1.0, %v1243
    %v1245 = vmul.f32 %v1242, %v1244
    %v1246 = vadd.f32 %v1242, %v1245
    %vm1247 = vweird.f32 %v1241
    %vm1248 = vweird.f32 %v1242
    %vm1249 = vmor %vm1247, %vm1248
    %v1250 = vsel %vm1249, %v1242, %v1246
    %v1251 = vand.u32 2147483647, %v1241
    %vm1252 = vcmp.eq.f32.partialorder %v1251, 8.507059e+37
    %v1253 = vand.u32 %v1241, 2147483648
    %v1254 = vor.u32 1.1754944e-38, %v1253
    %v1255 = vsel %vm1252, %v1254, %v1250
    %v1256 = vmul.f32 1.0, %v1255
    %v1257 = vxor.u32 %v1235, 2147483648
    %v1258 = vmul.f32 %v1257, 1.442695
    %v1259 = vpow.pop %v1258
    %v1260 = vadd.f32 %v1259, 1.0
    %v1261 = vrcp.pop %v1260
    %v1262 = vmul.f32 %v1260, %v1261
    %v1263 = vsub.f32 1.0, %v1262
    %v1264 = vmul.f32 %v1261, %v1263
    %v1265 = vadd.f32 %v1261, %v1264
    %vm1266 = vweird.f32 %v1260
    %vm1267 = vweird.f32 %v1261
    %vm1268 = vmor %vm1266, %vm1267
    %v1269 = vsel %vm1268, %v1261, %v1265
    %v1270 = vand.u32 2147483647, %v1260
    %vm1271 = vcmp.eq.f32.partialorder %v1270, 8.507059e+37
    %v1272 = vand.u32 %v1260, 2147483648
    %v1273 = vor.u32 1.1754944e-38, %v1272
    %v1274 = vsel %vm1271, %v1273, %v1269
    %v1275 = vmul.f32 1.0, %v1274
    %v1276 = vtanh.pop %v1236
    %v1277 = vxor.u32 %v1237, 2147483648
    %v1278 = vmul.f32 %v1277, 1.442695
    %v1279 = vpow.pop %v1278
    %v1280 = vadd.f32 %v1279, 1.0
    %v1281 = vrcp.pop %v1280
    %v1282 = vmul.f32 %v1280, %v1281
    %v1283 = vsub.f32 1.0, %v1282
    %v1284 = vmul.f32 %v1281, %v1283
    %v1285 = vadd.f32 %v1281, %v1284
    %vm1286 = vweird.f32 %v1280
    %vm1287 = vweird.f32 %v1281
    %vm1288 = vmor %vm1286, %vm1287
    %v1289 = vsel %vm1288, %v1281, %v1285
    %v1290 = vand.u32 2147483647, %v1280
    %vm1291 = vcmp.eq.f32.partialorder %v1290, 8.507059e+37
    %v1292 = vand.u32 %v1280, 2147483648
    %v1293 = vor.u32 1.1754944e-38, %v1292
    %v1294 = vsel %vm1291, %v1293, %v1289
    %v1295 = vmul.f32 1.0, %v1294
    %v1296 = vld [vmem:[#allocation4] sm:$0xff]
    %v1297 = vmul.f32 %v1275, %v1296
    %v1298 = vmul.f32 %v1256, %v1276
    %v1299 = vadd.f32 %v1297, %v1298
    %v1300 = vtanh.pop %v1299
    %v1301 = vmul.f32 %v1295, %v1300
    %1302 = vst [vmem:[#allocation4] sm:$0xff] %v1299
    %1303 = vst [vmem:[#allocation3] sm:$0xff] %v1301
    %1304 = vst [vmem:[#allocation8 + $0x28] sm:$0xff] %v1301
    %v1305 = vld [vmem:[#allocation2 + $0xc0] sm:$0xff]
    %v1306 = vld [vmem:[#allocation2 + $0xc8] sm:$0xff]
    %v1307 = vld [vmem:[#allocation2 + $0xd0] sm:$0xff]
    %v1308 = vld [vmem:[#allocation2 + $0xd8] sm:$0xff]
    %v1309 = vld [vmem:[#allocation3] sm:$0xff]
    %1310 = vmatpush.msra.mxu0 %v365
    %1311 = vmatpush.msra.mxu0 %v361
    %1312 = vmatpush.msra.mxu0 %v357
    %1313 = vmatpush.msra.mxu0 %v353
    %1314 = vmatpush.msra.mxu0 %v349
    %1315 = vmatpush.msra.mxu0 %v345
    %1316 = vmatpush.msra.mxu0 %v341
    %1317 = vmatpush.msra.mxu0 %v337
    %1318 = vmatpush.msra.mxu0 %v333
    %1319 = vmatpush.msra.mxu0 %v329
    %1320 = vmatpush.msra.mxu0 %v325
    %1321 = vmatpush.msra.mxu0 %v321
    %1322 = vmatpush.msra.mxu0 %v317
    %1323 = vmatpush.msra.mxu0 %v313
    %1324 = vmatpush.msra.mxu0 %v309
    %1325 = vmatpush.msra.mxu0 %v305
    %1326 = vmatmul.f32.gmra.mxu0 %v1309
    %v1327 = vpop.f32.mrf.mxu0
    %v1328 = vadd.f32 0.0, %v1327
    %1329 = vdwg.mxu0
    %1330 = vmatpush.msra.mxu0 %v366
    %1331 = vmatpush.msra.mxu0 %v362
    %1332 = vmatpush.msra.mxu0 %v358
    %1333 = vmatpush.msra.mxu0 %v354
    %1334 = vmatpush.msra.mxu0 %v350
    %1335 = vmatpush.msra.mxu0 %v346
    %1336 = vmatpush.msra.mxu0 %v342
    %1337 = vmatpush.msra.mxu0 %v338
    %1338 = vmatpush.msra.mxu0 %v334
    %1339 = vmatpush.msra.mxu0 %v330
    %1340 = vmatpush.msra.mxu0 %v326
    %1341 = vmatpush.msra.mxu0 %v322
    %1342 = vmatpush.msra.mxu0 %v318
    %1343 = vmatpush.msra.mxu0 %v314
    %1344 = vmatpush.msra.mxu0 %v310
    %1345 = vmatpush.msra.mxu0 %v306
    %1346 = vmatmul.f32.gmra.mxu0 %v1309
    %v1347 = vpop.f32.mrf.mxu0
    %v1348 = vadd.f32 0.0, %v1347
    %1349 = vdwg.mxu0
    %1350 = vmatpush.msra.mxu0 %v367
    %1351 = vmatpush.msra.mxu0 %v363
    %1352 = vmatpush.msra.mxu0 %v359
    %1353 = vmatpush.msra.mxu0 %v355
    %1354 = vmatpush.msra.mxu0 %v351
    %1355 = vmatpush.msra.mxu0 %v347
    %1356 = vmatpush.msra.mxu0 %v343
    %1357 = vmatpush.msra.mxu0 %v339
    %1358 = vmatpush.msra.mxu0 %v335
    %1359 = vmatpush.msra.mxu0 %v331
    %1360 = vmatpush.msra.mxu0 %v327
    %1361 = vmatpush.msra.mxu0 %v323
    %1362 = vmatpush.msra.mxu0 %v319
    %1363 = vmatpush.msra.mxu0 %v315
    %1364 = vmatpush.msra.mxu0 %v311
    %1365 = vmatpush.msra.mxu0 %v307
    %1366 = vmatmul.f32.gmra.mxu0 %v1309
    %v1367 = vpop.f32.mrf.mxu0
    %v1368 = vadd.f32 0.0, %v1367
    %1369 = vdwg.mxu0
    %1370 = vmatpush.msra.mxu0 %v368
    %1371 = vmatpush.msra.mxu0 %v364
    %1372 = vmatpush.msra.mxu0 %v360
    %1373 = vmatpush.msra.mxu0 %v356
    %1374 = vmatpush.msra.mxu0 %v352
    %1375 = vmatpush.msra.mxu0 %v348
    %1376 = vmatpush.msra.mxu0 %v344
    %1377 = vmatpush.msra.mxu0 %v340
    %1378 = vmatpush.msra.mxu0 %v336
    %1379 = vmatpush.msra.mxu0 %v332
    %1380 = vmatpush.msra.mxu0 %v328
    %1381 = vmatpush.msra.mxu0 %v324
    %1382 = vmatpush.msra.mxu0 %v320
    %1383 = vmatpush.msra.mxu0 %v316
    %1384 = vmatpush.msra.mxu0 %v312
    %1385 = vmatpush.msra.mxu0 %v308
    %1386 = vmatmul.f32.gmra.mxu0 %v1309
    %v1387 = vpop.f32.mrf.mxu0
    %v1388 = vadd.f32 0.0, %v1387
    %1389 = vdwg.mxu0
    %v1390 = vadd.f32 %v1305, %v1328
    %v1391 = vadd.f32 %v1306, %v1348
    %v1392 = vadd.f32 %v1307, %v1368
    %v1393 = vadd.f32 %v1308, %v1388
    %v1394 = vxor.u32 %v1390, 2147483648
    %v1395 = vmul.f32 %v1394, 1.442695
    %v1396 = vpow.pop %v1395
    %v1397 = vadd.f32 %v1396, 1.0
    %v1398 = vrcp.pop %v1397
    %v1399 = vmul.f32 %v1397, %v1398
    %v1400 = vsub.f32 1.0, %v1399
    %v1401 = vmul.f32 %v1398, %v1400
    %v1402 = vadd.f32 %v1398, %v1401
    %vm1403 = vweird.f32 %v1397
    %vm1404 = vweird.f32 %v1398
    %vm1405 = vmor %vm1403, %vm1404
    %v1406 = vsel %vm1405, %v1398, %v1402
    %v1407 = vand.u32 2147483647, %v1397
    %vm1408 = vcmp.eq.f32.partialorder %v1407, 8.507059e+37
    %v1409 = vand.u32 %v1397, 2147483648
    %v1410 = vor.u32 1.1754944e-38, %v1409
    %v1411 = vsel %vm1408, %v1410, %v1406
    %v1412 = vmul.f32 1.0, %v1411
    %v1413 = vxor.u32 %v1391, 2147483648
    %v1414 = vmul.f32 %v1413, 1.442695
    %v1415 = vpow.pop %v1414
    %v1416 = vadd.f32 %v1415, 1.0
    %v1417 = vrcp.pop %v1416
    %v1418 = vmul.f32 %v1416, %v1417
    %v1419 = vsub.f32 1.0, %v1418
    %v1420 = vmul.f32 %v1417, %v1419
    %v1421 = vadd.f32 %v1417, %v1420
    %vm1422 = vweird.f32 %v1416
    %vm1423 = vweird.f32 %v1417
    %vm1424 = vmor %vm1422, %vm1423
    %v1425 = vsel %vm1424, %v1417, %v1421
    %v1426 = vand.u32 2147483647, %v1416
    %vm1427 = vcmp.eq.f32.partialorder %v1426, 8.507059e+37
    %v1428 = vand.u32 %v1416, 2147483648
    %v1429 = vor.u32 1.1754944e-38, %v1428
    %v1430 = vsel %vm1427, %v1429, %v1425
    %v1431 = vmul.f32 1.0, %v1430
    %v1432 = vtanh.pop %v1392
    %v1433 = vxor.u32 %v1393, 2147483648
    %v1434 = vmul.f32 %v1433, 1.442695
    %v1435 = vpow.pop %v1434
    %v1436 = vadd.f32 %v1435, 1.0
    %v1437 = vrcp.pop %v1436
    %v1438 = vmul.f32 %v1436, %v1437
    %v1439 = vsub.f32 1.0, %v1438
    %v1440 = vmul.f32 %v1437, %v1439
    %v1441 = vadd.f32 %v1437, %v1440
    %vm1442 = vweird.f32 %v1436
    %vm1443 = vweird.f32 %v1437
    %vm1444 = vmor %vm1442, %vm1443
    %v1445 = vsel %vm1444, %v1437, %v1441
    %v1446 = vand.u32 2147483647, %v1436
    %vm1447 = vcmp.eq.f32.partialorder %v1446, 8.507059e+37
    %v1448 = vand.u32 %v1436, 2147483648
    %v1449 = vor.u32 1.1754944e-38, %v1448
    %v1450 = vsel %vm1447, %v1449, %v1445
    %v1451 = vmul.f32 1.0, %v1450
    %v1452 = vld [vmem:[#allocation4] sm:$0xff]
    %v1453 = vmul.f32 %v1431, %v1452
    %v1454 = vmul.f32 %v1412, %v1432
    %v1455 = vadd.f32 %v1453, %v1454
    %v1456 = vtanh.pop %v1455
    %v1457 = vmul.f32 %v1451, %v1456
    %1458 = vst [vmem:[#allocation4] sm:$0xff] %v1455
    %1459 = vst [vmem:[#allocation3] sm:$0xff] %v1457
    %1460 = vst [vmem:[#allocation8 + $0x30] sm:$0xff] %v1457
    %v1461 = vld [vmem:[#allocation2 + $0xe0] sm:$0xff]
    %v1462 = vld [vmem:[#allocation2 + $0xe8] sm:$0xff]
    %v1463 = vld [vmem:[#allocation2 + $0xf0] sm:$0xff]
    %v1464 = vld [vmem:[#allocation2 + $0xf8] sm:$0xff]
    %v1465 = vld [vmem:[#allocation3] sm:$0xff]
    %1466 = vmatpush.msra.mxu0 %v365
    %1467 = vmatpush.msra.mxu0 %v361
    %1468 = vmatpush.msra.mxu0 %v357
    %1469 = vmatpush.msra.mxu0 %v353
    %1470 = vmatpush.msra.mxu0 %v349
    %1471 = vmatpush.msra.mxu0 %v345
    %1472 = vmatpush.msra.mxu0 %v341
    %1473 = vmatpush.msra.mxu0 %v337
    %1474 = vmatpush.msra.mxu0 %v333
    %1475 = vmatpush.msra.mxu0 %v329
    %1476 = vmatpush.msra.mxu0 %v325
    %1477 = vmatpush.msra.mxu0 %v321
    %1478 = vmatpush.msra.mxu0 %v317
    %1479 = vmatpush.msra.mxu0 %v313
    %1480 = vmatpush.msra.mxu0 %v309
    %1481 = vmatpush.msra.mxu0 %v305
    %1482 = vmatmul.f32.gmra.mxu0 %v1465
    %v1483 = vpop.f32.mrf.mxu0
    %v1484 = vadd.f32 0.0, %v1483
    %1485 = vdwg.mxu0
    %1486 = vmatpush.msra.mxu0 %v366
    %1487 = vmatpush.msra.mxu0 %v362
    %1488 = vmatpush.msra.mxu0 %v358
    %1489 = vmatpush.msra.mxu0 %v354
    %1490 = vmatpush.msra.mxu0 %v350
    %1491 = vmatpush.msra.mxu0 %v346
    %1492 = vmatpush.msra.mxu0 %v342
    %1493 = vmatpush.msra.mxu0 %v338
    %1494 = vmatpush.msra.mxu0 %v334
    %1495 = vmatpush.msra.mxu0 %v330
    %1496 = vmatpush.msra.mxu0 %v326
    %1497 = vmatpush.msra.mxu0 %v322
    %1498 = vmatpush.msra.mxu0 %v318
    %1499 = vmatpush.msra.mxu0 %v314
    %1500 = vmatpush.msra.mxu0 %v310
    %1501 = vmatpush.msra.mxu0 %v306
    %1502 = vmatmul.f32.gmra.mxu0 %v1465
    %v1503 = vpop.f32.mrf.mxu0
    %v1504 = vadd.f32 0.0, %v1503
    %1505 = vdwg.mxu0
    %1506 = vmatpush.msra.mxu0 %v367
    %1507 = vmatpush.msra.mxu0 %v363
    %1508 = vmatpush.msra.mxu0 %v359
    %1509 = vmatpush.msra.mxu0 %v355
    %1510 = vmatpush.msra.mxu0 %v351
    %1511 = vmatpush.msra.mxu0 %v347
    %1512 = vmatpush.msra.mxu0 %v343
    %1513 = vmatpush.msra.mxu0 %v339
    %1514 = vmatpush.msra.mxu0 %v335
    %1515 = vmatpush.msra.mxu0 %v331
    %1516 = vmatpush.msra.mxu0 %v327
    %1517 = vmatpush.msra.mxu0 %v323
    %1518 = vmatpush.msra.mxu0 %v319
    %1519 = vmatpush.msra.mxu0 %v315
    %1520 = vmatpush.msra.mxu0 %v311
    %1521 = vmatpush.msra.mxu0 %v307
    %1522 = vmatmul.f32.gmra.mxu0 %v1465
    %v1523 = vpop.f32.mrf.mxu0
    %v1524 = vadd.f32 0.0, %v1523
    %1525 = vdwg.mxu0
    %1526 = vmatpush.msra.mxu0 %v368
    %1527 = vmatpush.msra.mxu0 %v364
    %1528 = vmatpush.msra.mxu0 %v360
    %1529 = vmatpush.msra.mxu0 %v356
    %1530 = vmatpush.msra.mxu0 %v352
    %1531 = vmatpush.msra.mxu0 %v348
    %1532 = vmatpush.msra.mxu0 %v344
    %1533 = vmatpush.msra.mxu0 %v340
    %1534 = vmatpush.msra.mxu0 %v336
    %1535 = vmatpush.msra.mxu0 %v332
    %1536 = vmatpush.msra.mxu0 %v328
    %1537 = vmatpush.msra.mxu0 %v324
    %1538 = vmatpush.msra.mxu0 %v320
    %1539 = vmatpush.msra.mxu0 %v316
    %1540 = vmatpush.msra.mxu0 %v312
    %1541 = vmatpush.msra.mxu0 %v308
    %1542 = vmatmul.f32.gmra.mxu0 %v1465
    %v1543 = vpop.f32.mrf.mxu0
    %v1544 = vadd.f32 0.0, %v1543
    %1545 = vdwg.mxu0
    %v1546 = vadd.f32 %v1461, %v1484
    %v1547 = vadd.f32 %v1462, %v1504
    %v1548 = vadd.f32 %v1463, %v1524
    %v1549 = vadd.f32 %v1464, %v1544
    %v1550 = vxor.u32 %v1546, 2147483648
    %v1551 = vmul.f32 %v1550, 1.442695
    %v1552 = vpow.pop %v1551
    %v1553 = vadd.f32 %v1552, 1.0
    %v1554 = vrcp.pop %v1553
    %v1555 = vmul.f32 %v1553, %v1554
    %v1556 = vsub.f32 1.0, %v1555
    %v1557 = vmul.f32 %v1554, %v1556
    %v1558 = vadd.f32 %v1554, %v1557
    %vm1559 = vweird.f32 %v1553
    %vm1560 = vweird.f32 %v1554
    %vm1561 = vmor %vm1559, %vm1560
    %v1562 = vsel %vm1561, %v1554, %v1558
    %v1563 = vand.u32 2147483647, %v1553
    %vm1564 = vcmp.eq.f32.partialorder %v1563, 8.507059e+37
    %v1565 = vand.u32 %v1553, 2147483648
    %v1566 = vor.u32 1.1754944e-38, %v1565
    %v1567 = vsel %vm1564, %v1566, %v1562
    %v1568 = vmul.f32 1.0, %v1567
    %v1569 = vxor.u32 %v1547, 2147483648
    %v1570 = vmul.f32 %v1569, 1.442695
    %v1571 = vpow.pop %v1570
    %v1572 = vadd.f32 %v1571, 1.0
    %v1573 = vrcp.pop %v1572
    %v1574 = vmul.f32 %v1572, %v1573
    %v1575 = vsub.f32 1.0, %v1574
    %v1576 = vmul.f32 %v1573, %v1575
    %v1577 = vadd.f32 %v1573, %v1576
    %vm1578 = vweird.f32 %v1572
    %vm1579 = vweird.f32 %v1573
    %vm1580 = vmor %vm1578, %vm1579
    %v1581 = vsel %vm1580, %v1573, %v1577
    %v1582 = vand.u32 2147483647, %v1572
    %vm1583 = vcmp.eq.f32.partialorder %v1582, 8.507059e+37
    %v1584 = vand.u32 %v1572, 2147483648
    %v1585 = vor.u32 1.1754944e-38, %v1584
    %v1586 = vsel %vm1583, %v1585, %v1581
    %v1587 = vmul.f32 1.0, %v1586
    %v1588 = vtanh.pop %v1548
    %v1589 = vxor.u32 %v1549, 2147483648
    %v1590 = vmul.f32 %v1589, 1.442695
    %v1591 = vpow.pop %v1590
    %v1592 = vadd.f32 %v1591, 1.0
    %v1593 = vrcp.pop %v1592
    %v1594 = vmul.f32 %v1592, %v1593
    %v1595 = vsub.f32 1.0, %v1594
    %v1596 = vmul.f32 %v1593, %v1595
    %v1597 = vadd.f32 %v1593, %v1596
    %vm1598 = vweird.f32 %v1592
    %vm1599 = vweird.f32 %v1593
    %vm1600 = vmor %vm1598, %vm1599
    %v1601 = vsel %vm1600, %v1593, %v1597
    %v1602 = vand.u32 2147483647, %v1592
    %vm1603 = vcmp.eq.f32.partialorder %v1602, 8.507059e+37
    %v1604 = vand.u32 %v1592, 2147483648
    %v1605 = vor.u32 1.1754944e-38, %v1604
    %v1606 = vsel %vm1603, %v1605, %v1601
    %v1607 = vmul.f32 1.0, %v1606
    %v1608 = vld [vmem:[#allocation4] sm:$0xff]
    %v1609 = vmul.f32 %v1587, %v1608
    %v1610 = vmul.f32 %v1568, %v1588
    %v1611 = vadd.f32 %v1609, %v1610
    %v1612 = vtanh.pop %v1611
    %v1613 = vmul.f32 %v1607, %v1612
    %1614 = vst [vmem:[#allocation4] sm:$0xff] %v1611
    %1615 = vst [vmem:[#allocation3] sm:$0xff] %v1613
    %1616 = vst [vmem:[#allocation8 + $0x38] sm:$0xff] %v1613
    // Predicated region
    $region26: #{tpu_custom_call.1} parent=1 // pred_check
      %p1617 = pneg %p38
    $region27: #{tpu_custom_call.1} parent=1 // pred_check_branch
      %1619 = sbr.rel (%p1617) target = $region29
    $region28: #{tpu_custom_call.1} parent=1 // pred_region
      %v1620 = vld [vmem:[#allocation3] sm:$0xff]
      %1621 = vst [vmem:[#allocation9] sm:$0xff] %v1620
      %v1622 = vld [vmem:[#allocation4] sm:$0xff]
      %1623 = vst [vmem:[#allocation11] sm:$0xff] %v1622
    $region29: #{tpu_custom_call.1} parent=1 // pred_fallthru
      _
    // Predicated region
    $region30: #{tpu_custom_call.1} parent=1 // pred_check
      _
    $region31: #{tpu_custom_call.1} parent=1 // pred_check_branch
      %1625 = sbr.rel (0) target = $region33
    $region32: #{tpu_custom_call.1} parent=1 // pred_region
      %1627 = vsyncadd [#allocation7], 0
      %s1628 = sshll.u32 [#allocation8], 4
      %s1629 = int_to_ptr.vmem [resolvable:$true] %s1628
      %s1630 = sshll.u32 %s4, 4
      %s1631 = int_to_ptr.hbm [resolvable:$true] %s1630
      %1636 = dma.vmem_to_hbm [thread:$0]  %s1629, 1024, %s1631, [#allocation7], 128, 128, 8
    $region33: #{tpu_custom_call.1} parent=1 // pred_fallthru
      _
    // Predicated region
    $region34: #{tpu_custom_call.1} parent=1 // pred_check
      _
    $region35: #{tpu_custom_call.1} parent=1 // pred_check_branch
      %1638 = sbr.rel (0) target = $region37
    $region36: #{tpu_custom_call.1} parent=1 // pred_region
      %1640 = vsyncadd [#allocation10], 0
      %s1642 = sshll.u32 [#allocation9], 4
      %s1643 = int_to_ptr.vmem [resolvable:$true] %s1642
      %s1644 = sshll.u32 %s5, 4
      %s1645 = int_to_ptr.hbm [resolvable:$true] %s1644
      %1647 = dma.vmem_to_hbm [thread:$0]  %s1643, 128, %s1645, [#allocation10]
    $region37: #{tpu_custom_call.1} parent=1 // pred_fallthru
      _
    // Predicated region
    $region38: #{tpu_custom_call.1} parent=1 // pred_check
      _
    $region39: #{tpu_custom_call.1} parent=1 // pred_check_branch
      %1649 = sbr.rel (0) target = $region41
    $region40: #{tpu_custom_call.1} parent=1 // pred_region
      %1651 = vsyncadd [#allocation10], 0
      %s1653 = sshll.u32 [#allocation11], 4
      %s1654 = int_to_ptr.vmem [resolvable:$true] %s1653
      %s1655 = sshll.u32 %s6, 4
      %s1656 = int_to_ptr.hbm [resolvable:$true] %s1655
      %1658 = dma.vmem_to_hbm [thread:$0]  %s1654, 128, %s1656, [#allocation10]
    $region41: #{tpu_custom_call.1} parent=1 // pred_fallthru
      _
    // Predicated region
    $region42: #{tpu_custom_call.1} parent=1 // pred_check
      _
    $region43: #{tpu_custom_call.1} parent=1 // pred_check_branch
      %1660 = sbr.rel (0) target = $region45
    $region44: #{tpu_custom_call.1} parent=1 // pred_region
      %1662 = dma.done [#allocation7], 1024
    $region45: #{tpu_custom_call.1} parent=1 // pred_fallthru
      _
    // Predicated region
    $region46: #{tpu_custom_call.1} parent=1 // pred_check
      _
    $region47: #{tpu_custom_call.1} parent=1 // pred_check_branch
      %1664 = sbr.rel (0) target = $region49
    $region48: #{tpu_custom_call.1} parent=1 // pred_region
      %1666 = dma.done [#allocation10], 128
    $region49: #{tpu_custom_call.1} parent=1 // pred_fallthru
      _
    // Predicated region
    $region50: #{tpu_custom_call.1} parent=1 // pred_check
      _
    $region51: #{tpu_custom_call.1} parent=1 // pred_check_branch
      %1668 = sbr.rel (0) target = $region53
    $region52: #{tpu_custom_call.1} parent=1 // pred_region
      %1670 = dma.done [#allocation10], 128
    $region53: #{tpu_custom_call.1} parent=1 // pred_fallthru
      _
    %1671 = vsyncpa [#allocation6], 1
    %1672 = vsyncpa [#allocation7], 1
    %1673 = vsyncpa [#allocation10], 1

</llo_original>
